<compile_context>
chip_gen: v6e
topology: v6e:2x2x1
jax: 0.10.0
libtpu: 0.0.40
codegen_flags: <defaults>
</compile_context>

<pallas_src>
import functools

import jax
import jax.numpy as jnp
from jax import lax
from jax.experimental import pallas as pl
from jax.experimental.pallas import tpu as pltpu


def _dwsep_kernel(x_ref, dw_w_ref, dw_b_ref, pw_w_ref, pw_b_ref, out_ref, *scratch,
                  K, stride, padding, H, W, H_out, W_out, C, C_out):
    """One batch element per grid step.  NCHW, per-channel spatial planes.

    x_ref    : [1, C, H, W]              VMEM
    dw_w_ref : [C, K*K]                  SMEM  depthwise taps, col t = dy*K + dx
    dw_b_ref : [C]                       SMEM
    pw_w_ref : [C_out, C]                SMEM  pointwise mixing weights
    pw_b_ref : [C_out]                   SMEM
    out_ref  : [1, C_out, H_out, W_out]  VMEM  (native NCHW output tile)
    scratch  : ([C, H+2P, W+2P] VMEM,)   only when padding > 0
    """
    f32 = jnp.float32
    P = padding

    if P > 0:
        xpad_ref = scratch[0]
        Hp, Wp = H + 2 * P, W + 2 * P
        # Zero only the thin border; the interior is fully overwritten each step.
        # (Done every step so the "parallel" batch axis is safe on megacore.)
        xpad_ref[:, :P, :] = jnp.zeros((C, P, Wp), f32)
        xpad_ref[:, P + H:, :] = jnp.zeros((C, P, Wp), f32)
        xpad_ref[:, :, :P] = jnp.zeros((C, Hp, P), f32)
        xpad_ref[:, :, P + W:] = jnp.zeros((C, Hp, P), f32)
        # In-VMEM padding (no padded HBM copy of x).
        xpad_ref[:, P:P + H, P:P + W] = x_ref[0].astype(f32)

        def window(c, dy, dx):
            if stride == 1:
                return xpad_ref[c, dy:dy + H_out, dx:dx + W_out]
            # TODO(synk): strided (stride > 1) multi-dim window reads via pl.ds
            # strides are untested on Mosaic; verify lowering before using.
            return xpad_ref[c, pl.ds(dy, H_out, stride=stride),
                            pl.ds(dx, W_out, stride=stride)]
    else:
        def window(c, dy, dx):
            if stride == 1:
                return x_ref[0, c, dy:dy + H_out, dx:dx + W_out].astype(f32)
            return x_ref[0, c, pl.ds(dy, H_out, stride=stride),
                         pl.ds(dx, W_out, stride=stride)].astype(f32)

    # Depthwise KxK conv: C*K*K unrolled scalar-broadcast FMAs over [H_out, W_out]
    # planes (W on lanes).  Tap weights come from SMEM scalars -> no cross-lane
    # broadcasts, no relayouts.
    dw_planes = []
    for c in range(C):
        acc = jnp.full((H_out, W_out), dw_b_ref[c], f32)
        for dy in range(K):
            for dx in range(K):
                acc = acc + dw_w_ref[c, dy * K + dx] * window(c, dy, dx)
        dw_planes.append(acc)

    # Pointwise 1x1 conv: channel mixing with SMEM scalar weights on the VPU
    # (C and C_out are small here, so the MXU would be contraction-starved).
    # Output is written directly in NCHW order.
    for o in range(C_out):
        y = jnp.full((H_out, W_out), pw_b_ref[o], f32)
        for c in range(C):
            y = y + pw_w_ref[o, c] * dw_planes[c]
        out_ref[0, o] = y.astype(out_ref.dtype)


def depthwise_separable_conv(x, params, *, kernel_size, stride=1, padding=0):
    """x: [B, C, H, W] float32 (NCHW, matching the PyTorch module).

    Returns [B, C_out, H_out, W_out] (NCHW, no wrapper transposes needed).
    """
    B, C, H, W = x.shape
    K = kernel_size
    H_out = (H + 2 * padding - K) // stride + 1
    W_out = (W + 2 * padding - K) // stride + 1
    C_out = params["pw_w"].shape[0]
    f32 = jnp.float32

    x = x.astype(f32)
    dw_w = params["dw_w"].reshape(C, K * K).astype(f32)      # [C, K*K]
    dw_b = params["dw_b"].reshape(C).astype(f32)              # [C]
    pw_w = params["pw_w"].reshape(C_out, C).astype(f32)       # [C_out, C]
    pw_b = params["pw_b"].reshape(C_out).astype(f32)          # [C_out]

    kernel = functools.partial(
        _dwsep_kernel, K=K, stride=stride, padding=padding,
        H=H, W=W, H_out=H_out, W_out=W_out, C=C, C_out=C_out)

    scratch_shapes = []
    if padding > 0:
        scratch_shapes = [pltpu.VMEM((C, H + 2 * padding, W + 2 * padding), f32)]

    smem_spec = pl.BlockSpec(memory_space=pltpu.MemorySpace.SMEM)

    out = pl.pallas_call(
        kernel,
        out_shape=jax.ShapeDtypeStruct((B, C_out, H_out, W_out), f32),
        grid=(B,),
        in_specs=[
            pl.BlockSpec((1, C, H, W), lambda b: (b, 0, 0, 0)),
            smem_spec,   # dw_w
            smem_spec,   # dw_b
            smem_spec,   # pw_w
            smem_spec,   # pw_b
        ],
        out_specs=pl.BlockSpec((1, C_out, H_out, W_out), lambda b: (b, 0, 0, 0)),
        scratch_shapes=scratch_shapes,
        compiler_params=pltpu.CompilerParams(
            dimension_semantics=("parallel",),
        ),
    )(x, dw_w, dw_b, pw_w, pw_b)
    return out


def init_params(key, in_channels, out_channels, kernel_size):
    """Deterministic synthetic parameters with PyTorch layouts."""
    C, Co, K = in_channels, out_channels, kernel_size
    ks = jax.random.split(key, 4)
    return {
        "dw_w": 0.3 * jax.random.normal(ks[0], (C, 1, K, K), jnp.float32),   # Conv2d(C,C,K,groups=C)
        "dw_b": 0.1 * jax.random.normal(ks[1], (C,), jnp.float32),
        "pw_w": 0.3 * jax.random.normal(ks[2], (Co, C, 1, 1), jnp.float32),  # Conv2d(C,Co,1)
        "pw_b": 0.1 * jax.random.normal(ks[3], (Co,), jnp.float32),
    }


def reference(x, params, *, kernel_size, stride=1, padding=0):
    """Pure-JAX (XLA conv, HIGHEST precision) reference of the PyTorch forward."""
    dn = ("NCHW", "OIHW", "NCHW")
    C = x.shape[1]
    prec = lax.Precision.HIGHEST
    dw = lax.conv_general_dilated(
        x, params["dw_w"], (stride, stride),
        [(padding, padding), (padding, padding)],
        dimension_numbers=dn, feature_group_count=C, precision=prec)
    dw = dw + params["dw_b"][None, :, None, None]
    pw = lax.conv_general_dilated(
        dw, params["pw_w"], (1, 1), [(0, 0), (0, 0)],
        dimension_numbers=dn, precision=prec)
    return pw + params["pw_b"][None, :, None, None]


if __name__ == "__main__":
    key = jax.random.PRNGKey(0)
    k_x, k_p = jax.random.split(key)

    B, C, H, W = 2, 4, 16, 16
    C_out, K, stride, padding = 8, 3, 1, 1

    x = jax.random.normal(k_x, (B, C, H, W), jnp.float32)
    params = init_params(k_p, C, C_out, K)

    fn = jax.jit(functools.partial(depthwise_separable_conv,
                                   kernel_size=K, stride=stride, padding=padding))
    out = jax.block_until_ready(fn(x, params))

    ref = reference(x, params, kernel_size=K, stride=stride, padding=padding)
    H_out = (H + 2 * padding - K) // stride + 1
    W_out = (W + 2 * padding - K) // stride + 1
    assert out.shape == (B, C_out, H_out, W_out)
    max_err = float(jnp.max(jnp.abs(out - ref)))
    if not (max_err < 1e-3):
        raise AssertionError(f"mismatch vs reference, max abs err = {max_err}")
    print("KERNEL_OK")
</pallas_src>

<mosaic_0001>
module attributes {stable_mosaic.version = 11 : i64} {
  func.func @_dwsep_kernel(%arg0: i32, %arg1: memref<1x4x16x16xf32, #tpu.memory_space<vmem>>, %arg2: memref<4x9xf32, #tpu.memory_space<smem>>, %arg3: memref<4xf32, #tpu.memory_space<smem>>, %arg4: memref<8x4xf32, #tpu.memory_space<smem>>, %arg5: memref<8xf32, #tpu.memory_space<smem>>, %arg6: memref<1x8x16x16xf32, #tpu.memory_space<vmem>>, %arg7: memref<4x18x18xf32, #tpu.memory_space<vmem>>) attributes {dimension_semantics = [#tpu.dimension_semantics<parallel>], iteration_bounds = array<i64: 2>, scalar_prefetch = 0 : i64, scratch_operands = 1 : i64, tpu.core_type = #tpu.core_type<tc>, window_params = [{transform_indices = @transform_0, window_bounds = array<i64: 1, 4, 16, 16>}, {transform_indices = @transform_1, window_bounds = array<i64: 4, 9>}, {transform_indices = @transform_2, window_bounds = array<i64: 4>}, {transform_indices = @transform_3, window_bounds = array<i64: 8, 4>}, {transform_indices = @transform_4, window_bounds = array<i64: 8>}, {transform_indices = @transform_5, window_bounds = array<i64: 1, 8, 16, 16>}]} {
    %cst = arith.constant 0.000000e+00 : f32
    %0 = vector.broadcast %cst : f32 to vector<4x1x18xf32>
    %c0 = arith.constant 0 : index
    %c0_0 = arith.constant 0 : index
    %c0_1 = arith.constant 0 : index
    %1 = vector.load %arg7[%c0, %c0_0, %c0_1] : memref<4x18x18xf32, #tpu.memory_space<vmem>>, vector<4x1x18xf32>
    tpu.vector_store %arg7[%c0, %c0_0, %c0_1], %0 {strides = array<i32>} : memref<4x18x18xf32, #tpu.memory_space<vmem>>, vector<4x1x18xf32>,
    %cst_2 = arith.constant 0.000000e+00 : f32
    %2 = vector.broadcast %cst_2 : f32 to vector<4x1x18xf32>
    %c0_3 = arith.constant 0 : index
    %c17 = arith.constant 17 : index
    %c0_4 = arith.constant 0 : index
    %3 = vector.load %arg7[%c0_3, %c17, %c0_4] : memref<4x18x18xf32, #tpu.memory_space<vmem>>, vector<4x1x18xf32>
    tpu.vector_store %arg7[%c0_3, %c17, %c0_4], %2 {strides = array<i32>} : memref<4x18x18xf32, #tpu.memory_space<vmem>>, vector<4x1x18xf32>,
    %cst_5 = arith.constant 0.000000e+00 : f32
    %4 = vector.broadcast %cst_5 : f32 to vector<4x18x1xf32>
    %c0_6 = arith.constant 0 : index
    %c0_7 = arith.constant 0 : index
    %c0_8 = arith.constant 0 : index
    %5 = vector.load %arg7[%c0_6, %c0_7, %c0_8] : memref<4x18x18xf32, #tpu.memory_space<vmem>>, vector<4x18x1xf32>
    tpu.vector_store %arg7[%c0_6, %c0_7, %c0_8], %4 {strides = array<i32>} : memref<4x18x18xf32, #tpu.memory_space<vmem>>, vector<4x18x1xf32>,
    %cst_9 = arith.constant 0.000000e+00 : f32
    %6 = vector.broadcast %cst_9 : f32 to vector<4x18x1xf32>
    %c0_10 = arith.constant 0 : index
    %c0_11 = arith.constant 0 : index
    %c17_12 = arith.constant 17 : index
    %7 = vector.load %arg7[%c0_10, %c0_11, %c17_12] : memref<4x18x18xf32, #tpu.memory_space<vmem>>, vector<4x18x1xf32>
    tpu.vector_store %arg7[%c0_10, %c0_11, %c17_12], %6 {strides = array<i32>} : memref<4x18x18xf32, #tpu.memory_space<vmem>>, vector<4x18x1xf32>,
    %c0_13 = arith.constant 0 : index
    %c0_14 = arith.constant 0 : index
    %c0_15 = arith.constant 0 : index
    %c0_16 = arith.constant 0 : index
    %8 = vector.load %arg1[%c0_13, %c0_14, %c0_15, %c0_16] : memref<1x4x16x16xf32, #tpu.memory_space<vmem>>, vector<1x4x16x16xf32>
    %9 = vector.shape_cast %8 : vector<1x4x16x16xf32> to vector<4x16x16xf32>
    %c0_17 = arith.constant 0 : index
    %c1 = arith.constant 1 : index
    %c1_18 = arith.constant 1 : index
    %10 = vector.load %arg7[%c0_17, %c1, %c1_18] : memref<4x18x18xf32, #tpu.memory_space<vmem>>, vector<4x16x16xf32>
    tpu.vector_store %arg7[%c0_17, %c1, %c1_18], %9 {strides = array<i32>} : memref<4x18x18xf32, #tpu.memory_space<vmem>>, vector<4x16x16xf32>,
    %c0_19 = arith.constant 0 : index
    %11 = memref.load %arg3[%c0_19] : memref<4xf32, #tpu.memory_space<smem>>
    %12 = vector.broadcast %11 : f32 to vector<16x16xf32>
    %c0_20 = arith.constant 0 : index
    %c0_21 = arith.constant 0 : index
    %13 = memref.load %arg2[%c0_20, %c0_21] : memref<4x9xf32, #tpu.memory_space<smem>>
    %c0_22 = arith.constant 0 : index
    %c0_23 = arith.constant 0 : index
    %c0_24 = arith.constant 0 : index
    %14 = vector.load %arg7[%c0_22, %c0_23, %c0_24] : memref<4x18x18xf32, #tpu.memory_space<vmem>>, vector<1x16x16xf32>
    %15 = vector.shape_cast %14 : vector<1x16x16xf32> to vector<16x16xf32>
    %16 = vector.broadcast %13 : f32 to vector<16x16xf32>
    %17 = arith.mulf %16, %15 : vector<16x16xf32>
    %18 = arith.addf %12, %17 : vector<16x16xf32>
    %c0_25 = arith.constant 0 : index
    %c1_26 = arith.constant 1 : index
    %19 = memref.load %arg2[%c0_25, %c1_26] : memref<4x9xf32, #tpu.memory_space<smem>>
    %c0_27 = arith.constant 0 : index
    %c0_28 = arith.constant 0 : index
    %c1_29 = arith.constant 1 : index
    %20 = vector.load %arg7[%c0_27, %c0_28, %c1_29] : memref<4x18x18xf32, #tpu.memory_space<vmem>>, vector<1x16x16xf32>
    %21 = vector.shape_cast %20 : vector<1x16x16xf32> to vector<16x16xf32>
    %22 = vector.broadcast %19 : f32 to vector<16x16xf32>
    %23 = arith.mulf %22, %21 : vector<16x16xf32>
    %24 = arith.addf %18, %23 : vector<16x16xf32>
    %c0_30 = arith.constant 0 : index
    %c2 = arith.constant 2 : index
    %25 = memref.load %arg2[%c0_30, %c2] : memref<4x9xf32, #tpu.memory_space<smem>>
    %c0_31 = arith.constant 0 : index
    %c0_32 = arith.constant 0 : index
    %c2_33 = arith.constant 2 : index
    %26 = vector.load %arg7[%c0_31, %c0_32, %c2_33] : memref<4x18x18xf32, #tpu.memory_space<vmem>>, vector<1x16x16xf32>
    %27 = vector.shape_cast %26 : vector<1x16x16xf32> to vector<16x16xf32>
    %28 = vector.broadcast %25 : f32 to vector<16x16xf32>
    %29 = arith.mulf %28, %27 : vector<16x16xf32>
    %30 = arith.addf %24, %29 : vector<16x16xf32>
    %c0_34 = arith.constant 0 : index
    %c3 = arith.constant 3 : index
    %31 = memref.load %arg2[%c0_34, %c3] : memref<4x9xf32, #tpu.memory_space<smem>>
    %c0_35 = arith.constant 0 : index
    %c1_36 = arith.constant 1 : index
    %c0_37 = arith.constant 0 : index
    %32 = vector.load %arg7[%c0_35, %c1_36, %c0_37] : memref<4x18x18xf32, #tpu.memory_space<vmem>>, vector<1x16x16xf32>
    %33 = vector.shape_cast %32 : vector<1x16x16xf32> to vector<16x16xf32>
    %34 = vector.broadcast %31 : f32 to vector<16x16xf32>
    %35 = arith.mulf %34, %33 : vector<16x16xf32>
    %36 = arith.addf %30, %35 : vector<16x16xf32>
    %c0_38 = arith.constant 0 : index
    %c4 = arith.constant 4 : index
    %37 = memref.load %arg2[%c0_38, %c4] : memref<4x9xf32, #tpu.memory_space<smem>>
    %c0_39 = arith.constant 0 : index
    %c1_40 = arith.constant 1 : index
    %c1_41 = arith.constant 1 : index
    %38 = vector.load %arg7[%c0_39, %c1_40, %c1_41] : memref<4x18x18xf32, #tpu.memory_space<vmem>>, vector<1x16x16xf32>
    %39 = vector.shape_cast %38 : vector<1x16x16xf32> to vector<16x16xf32>
    %40 = vector.broadcast %37 : f32 to vector<16x16xf32>
    %41 = arith.mulf %40, %39 : vector<16x16xf32>
    %42 = arith.addf %36, %41 : vector<16x16xf32>
    %c0_42 = arith.constant 0 : index
    %c5 = arith.constant 5 : index
    %43 = memref.load %arg2[%c0_42, %c5] : memref<4x9xf32, #tpu.memory_space<smem>>
    %c0_43 = arith.constant 0 : index
    %c1_44 = arith.constant 1 : index
    %c2_45 = arith.constant 2 : index
    %44 = vector.load %arg7[%c0_43, %c1_44, %c2_45] : memref<4x18x18xf32, #tpu.memory_space<vmem>>, vector<1x16x16xf32>
    %45 = vector.shape_cast %44 : vector<1x16x16xf32> to vector<16x16xf32>
    %46 = vector.broadcast %43 : f32 to vector<16x16xf32>
    %47 = arith.mulf %46, %45 : vector<16x16xf32>
    %48 = arith.addf %42, %47 : vector<16x16xf32>
    %c0_46 = arith.constant 0 : index
    %c6 = arith.constant 6 : index
    %49 = memref.load %arg2[%c0_46, %c6] : memref<4x9xf32, #tpu.memory_space<smem>>
    %c0_47 = arith.constant 0 : index
    %c2_48 = arith.constant 2 : index
    %c0_49 = arith.constant 0 : index
    %50 = vector.load %arg7[%c0_47, %c2_48, %c0_49] : memref<4x18x18xf32, #tpu.memory_space<vmem>>, vector<1x16x16xf32>
    %51 = vector.shape_cast %50 : vector<1x16x16xf32> to vector<16x16xf32>
    %52 = vector.broadcast %49 : f32 to vector<16x16xf32>
    %53 = arith.mulf %52, %51 : vector<16x16xf32>
    %54 = arith.addf %48, %53 : vector<16x16xf32>
    %c0_50 = arith.constant 0 : index
    %c7 = arith.constant 7 : index
    %55 = memref.load %arg2[%c0_50, %c7] : memref<4x9xf32, #tpu.memory_space<smem>>
    %c0_51 = arith.constant 0 : index
    %c2_52 = arith.constant 2 : index
    %c1_53 = arith.constant 1 : index
    %56 = vector.load %arg7[%c0_51, %c2_52, %c1_53] : memref<4x18x18xf32, #tpu.memory_space<vmem>>, vector<1x16x16xf32>
    %57 = vector.shape_cast %56 : vector<1x16x16xf32> to vector<16x16xf32>
    %58 = vector.broadcast %55 : f32 to vector<16x16xf32>
    %59 = arith.mulf %58, %57 : vector<16x16xf32>
    %60 = arith.addf %54, %59 : vector<16x16xf32>
    %c0_54 = arith.constant 0 : index
    %c8 = arith.constant 8 : index
    %61 = memref.load %arg2[%c0_54, %c8] : memref<4x9xf32, #tpu.memory_space<smem>>
    %c0_55 = arith.constant 0 : index
    %c2_56 = arith.constant 2 : index
    %c2_57 = arith.constant 2 : index
    %62 = vector.load %arg7[%c0_55, %c2_56, %c2_57] : memref<4x18x18xf32, #tpu.memory_space<vmem>>, vector<1x16x16xf32>
    %63 = vector.shape_cast %62 : vector<1x16x16xf32> to vector<16x16xf32>
    %64 = vector.broadcast %61 : f32 to vector<16x16xf32>
    %65 = arith.mulf %64, %63 : vector<16x16xf32>
    %66 = arith.addf %60, %65 : vector<16x16xf32>
    %c1_58 = arith.constant 1 : index
    %67 = memref.load %arg3[%c1_58] : memref<4xf32, #tpu.memory_space<smem>>
    %68 = vector.broadcast %67 : f32 to vector<16x16xf32>
    %c1_59 = arith.constant 1 : index
    %c0_60 = arith.constant 0 : index
    %69 = memref.load %arg2[%c1_59, %c0_60] : memref<4x9xf32, #tpu.memory_space<smem>>
    %c1_61 = arith.constant 1 : index
    %c0_62 = arith.constant 0 : index
    %c0_63 = arith.constant 0 : index
    %70 = vector.load %arg7[%c1_61, %c0_62, %c0_63] : memref<4x18x18xf32, #tpu.memory_space<vmem>>, vector<1x16x16xf32>
    %71 = vector.shape_cast %70 : vector<1x16x16xf32> to vector<16x16xf32>
    %72 = vector.broadcast %69 : f32 to vector<16x16xf32>
    %73 = arith.mulf %72, %71 : vector<16x16xf32>
    %74 = arith.addf %68, %73 : vector<16x16xf32>
    %c1_64 = arith.constant 1 : index
    %c1_65 = arith.constant 1 : index
    %75 = memref.load %arg2[%c1_64, %c1_65] : memref<4x9xf32, #tpu.memory_space<smem>>
    %c1_66 = arith.constant 1 : index
    %c0_67 = arith.constant 0 : index
    %c1_68 = arith.constant 1 : index
    %76 = vector.load %arg7[%c1_66, %c0_67, %c1_68] : memref<4x18x18xf32, #tpu.memory_space<vmem>>, vector<1x16x16xf32>
    %77 = vector.shape_cast %76 : vector<1x16x16xf32> to vector<16x16xf32>
    %78 = vector.broadcast %75 : f32 to vector<16x16xf32>
    %79 = arith.mulf %78, %77 : vector<16x16xf32>
    %80 = arith.addf %74, %79 : vector<16x16xf32>
    %c1_69 = arith.constant 1 : index
    %c2_70 = arith.constant 2 : index
    %81 = memref.load %arg2[%c1_69, %c2_70] : memref<4x9xf32, #tpu.memory_space<smem>>
    %c1_71 = arith.constant 1 : index
    %c0_72 = arith.constant 0 : index
    %c2_73 = arith.constant 2 : index
    %82 = vector.load %arg7[%c1_71, %c0_72, %c2_73] : memref<4x18x18xf32, #tpu.memory_space<vmem>>, vector<1x16x16xf32>
    %83 = vector.shape_cast %82 : vector<1x16x16xf32> to vector<16x16xf32>
    %84 = vector.broadcast %81 : f32 to vector<16x16xf32>
    %85 = arith.mulf %84, %83 : vector<16x16xf32>
    %86 = arith.addf %80, %85 : vector<16x16xf32>
    %c1_74 = arith.constant 1 : index
    %c3_75 = arith.constant 3 : index
    %87 = memref.load %arg2[%c1_74, %c3_75] : memref<4x9xf32, #tpu.memory_space<smem>>
    %c1_76 = arith.constant 1 : index
    %c1_77 = arith.constant 1 : index
    %c0_78 = arith.constant 0 : index
    %88 = vector.load %arg7[%c1_76, %c1_77, %c0_78] : memref<4x18x18xf32, #tpu.memory_space<vmem>>, vector<1x16x16xf32>
    %89 = vector.shape_cast %88 : vector<1x16x16xf32> to vector<16x16xf32>
    %90 = vector.broadcast %87 : f32 to vector<16x16xf32>
    %91 = arith.mulf %90, %89 : vector<16x16xf32>
    %92 = arith.addf %86, %91 : vector<16x16xf32>
    %c1_79 = arith.constant 1 : index
    %c4_80 = arith.constant 4 : index
    %93 = memref.load %arg2[%c1_79, %c4_80] : memref<4x9xf32, #tpu.memory_space<smem>>
    %c1_81 = arith.constant 1 : index
    %c1_82 = arith.constant 1 : index
    %c1_83 = arith.constant 1 : index
    %94 = vector.load %arg7[%c1_81, %c1_82, %c1_83] : memref<4x18x18xf32, #tpu.memory_space<vmem>>, vector<1x16x16xf32>
    %95 = vector.shape_cast %94 : vector<1x16x16xf32> to vector<16x16xf32>
    %96 = vector.broadcast %93 : f32 to vector<16x16xf32>
    %97 = arith.mulf %96, %95 : vector<16x16xf32>
    %98 = arith.addf %92, %97 : vector<16x16xf32>
    %c1_84 = arith.constant 1 : index
    %c5_85 = arith.constant 5 : index
    %99 = memref.load %arg2[%c1_84, %c5_85] : memref<4x9xf32, #tpu.memory_space<smem>>
    %c1_86 = arith.constant 1 : index
    %c1_87 = arith.constant 1 : index
    %c2_88 = arith.constant 2 : index
    %100 = vector.load %arg7[%c1_86, %c1_87, %c2_88] : memref<4x18x18xf32, #tpu.memory_space<vmem>>, vector<1x16x16xf32>
    %101 = vector.shape_cast %100 : vector<1x16x16xf32> to vector<16x16xf32>
    %102 = vector.broadcast %99 : f32 to vector<16x16xf32>
    %103 = arith.mulf %102, %101 : vector<16x16xf32>
    %104 = arith.addf %98, %103 : vector<16x16xf32>
    %c1_89 = arith.constant 1 : index
    %c6_90 = arith.constant 6 : index
    %105 = memref.load %arg2[%c1_89, %c6_90] : memref<4x9xf32, #tpu.memory_space<smem>>
    %c1_91 = arith.constant 1 : index
    %c2_92 = arith.constant 2 : index
    %c0_93 = arith.constant 0 : index
    %106 = vector.load %arg7[%c1_91, %c2_92, %c0_93] : memref<4x18x18xf32, #tpu.memory_space<vmem>>, vector<1x16x16xf32>
    %107 = vector.shape_cast %106 : vector<1x16x16xf32> to vector<16x16xf32>
    %108 = vector.broadcast %105 : f32 to vector<16x16xf32>
    %109 = arith.mulf %108, %107 : vector<16x16xf32>
    %110 = arith.addf %104, %109 : vector<16x16xf32>
    %c1_94 = arith.constant 1 : index
    %c7_95 = arith.constant 7 : index
    %111 = memref.load %arg2[%c1_94, %c7_95] : memref<4x9xf32, #tpu.memory_space<smem>>
    %c1_96 = arith.constant 1 : index
    %c2_97 = arith.constant 2 : index
    %c1_98 = arith.constant 1 : index
    %112 = vector.load %arg7[%c1_96, %c2_97, %c1_98] : memref<4x18x18xf32, #tpu.memory_space<vmem>>, vector<1x16x16xf32>
    %113 = vector.shape_cast %112 : vector<1x16x16xf32> to vector<16x16xf32>
    %114 = vector.broadcast %111 : f32 to vector<16x16xf32>
    %115 = arith.mulf %114, %113 : vector<16x16xf32>
    %116 = arith.addf %110, %115 : vector<16x16xf32>
    %c1_99 = arith.constant 1 : index
    %c8_100 = arith.constant 8 : index
    %117 = memref.load %arg2[%c1_99, %c8_100] : memref<4x9xf32, #tpu.memory_space<smem>>
    %c1_101 = arith.constant 1 : index
    %c2_102 = arith.constant 2 : index
    %c2_103 = arith.constant 2 : index
    %118 = vector.load %arg7[%c1_101, %c2_102, %c2_103] : memref<4x18x18xf32, #tpu.memory_space<vmem>>, vector<1x16x16xf32>
    %119 = vector.shape_cast %118 : vector<1x16x16xf32> to vector<16x16xf32>
    %120 = vector.broadcast %117 : f32 to vector<16x16xf32>
    %121 = arith.mulf %120, %119 : vector<16x16xf32>
    %122 = arith.addf %116, %121 : vector<16x16xf32>
    %c2_104 = arith.constant 2 : index
    %123 = memref.load %arg3[%c2_104] : memref<4xf32, #tpu.memory_space<smem>>
    %124 = vector.broadcast %123 : f32 to vector<16x16xf32>
    %c2_105 = arith.constant 2 : index
    %c0_106 = arith.constant 0 : index
    %125 = memref.load %arg2[%c2_105, %c0_106] : memref<4x9xf32, #tpu.memory_space<smem>>
    %c2_107 = arith.constant 2 : index
    %c0_108 = arith.constant 0 : index
    %c0_109 = arith.constant 0 : index
    %126 = vector.load %arg7[%c2_107, %c0_108, %c0_109] : memref<4x18x18xf32, #tpu.memory_space<vmem>>, vector<1x16x16xf32>
    %127 = vector.shape_cast %126 : vector<1x16x16xf32> to vector<16x16xf32>
    %128 = vector.broadcast %125 : f32 to vector<16x16xf32>
    %129 = arith.mulf %128, %127 : vector<16x16xf32>
    %130 = arith.addf %124, %129 : vector<16x16xf32>
    %c2_110 = arith.constant 2 : index
    %c1_111 = arith.constant 1 : index
    %131 = memref.load %arg2[%c2_110, %c1_111] : memref<4x9xf32, #tpu.memory_space<smem>>
    %c2_112 = arith.constant 2 : index
    %c0_113 = arith.constant 0 : index
    %c1_114 = arith.constant 1 : index
    %132 = vector.load %arg7[%c2_112, %c0_113, %c1_114] : memref<4x18x18xf32, #tpu.memory_space<vmem>>, vector<1x16x16xf32>
    %133 = vector.shape_cast %132 : vector<1x16x16xf32> to vector<16x16xf32>
    %134 = vector.broadcast %131 : f32 to vector<16x16xf32>
    %135 = arith.mulf %134, %133 : vector<16x16xf32>
    %136 = arith.addf %130, %135 : vector<16x16xf32>
    %c2_115 = arith.constant 2 : index
    %c2_116 = arith.constant 2 : index
    %137 = memref.load %arg2[%c2_115, %c2_116] : memref<4x9xf32, #tpu.memory_space<smem>>
    %c2_117 = arith.constant 2 : index
    %c0_118 = arith.constant 0 : index
    %c2_119 = arith.constant 2 : index
    %138 = vector.load %arg7[%c2_117, %c0_118, %c2_119] : memref<4x18x18xf32, #tpu.memory_space<vmem>>, vector<1x16x16xf32>
    %139 = vector.shape_cast %138 : vector<1x16x16xf32> to vector<16x16xf32>
    %140 = vector.broadcast %137 : f32 to vector<16x16xf32>
    %141 = arith.mulf %140, %139 : vector<16x16xf32>
    %142 = arith.addf %136, %141 : vector<16x16xf32>
    %c2_120 = arith.constant 2 : index
    %c3_121 = arith.constant 3 : index
    %143 = memref.load %arg2[%c2_120, %c3_121] : memref<4x9xf32, #tpu.memory_space<smem>>
    %c2_122 = arith.constant 2 : index
    %c1_123 = arith.constant 1 : index
    %c0_124 = arith.constant 0 : index
    %144 = vector.load %arg7[%c2_122, %c1_123, %c0_124] : memref<4x18x18xf32, #tpu.memory_space<vmem>>, vector<1x16x16xf32>
    %145 = vector.shape_cast %144 : vector<1x16x16xf32> to vector<16x16xf32>
    %146 = vector.broadcast %143 : f32 to vector<16x16xf32>
    %147 = arith.mulf %146, %145 : vector<16x16xf32>
    %148 = arith.addf %142, %147 : vector<16x16xf32>
    %c2_125 = arith.constant 2 : index
    %c4_126 = arith.constant 4 : index
    %149 = memref.load %arg2[%c2_125, %c4_126] : memref<4x9xf32, #tpu.memory_space<smem>>
    %c2_127 = arith.constant 2 : index
    %c1_128 = arith.constant 1 : index
    %c1_129 = arith.constant 1 : index
    %150 = vector.load %arg7[%c2_127, %c1_128, %c1_129] : memref<4x18x18xf32, #tpu.memory_space<vmem>>, vector<1x16x16xf32>
    %151 = vector.shape_cast %150 : vector<1x16x16xf32> to vector<16x16xf32>
    %152 = vector.broadcast %149 : f32 to vector<16x16xf32>
    %153 = arith.mulf %152, %151 : vector<16x16xf32>
    %154 = arith.addf %148, %153 : vector<16x16xf32>
    %c2_130 = arith.constant 2 : index
    %c5_131 = arith.constant 5 : index
    %155 = memref.load %arg2[%c2_130, %c5_131] : memref<4x9xf32, #tpu.memory_space<smem>>
    %c2_132 = arith.constant 2 : index
    %c1_133 = arith.constant 1 : index
    %c2_134 = arith.constant 2 : index
    %156 = vector.load %arg7[%c2_132, %c1_133, %c2_134] : memref<4x18x18xf32, #tpu.memory_space<vmem>>, vector<1x16x16xf32>
    %157 = vector.shape_cast %156 : vector<1x16x16xf32> to vector<16x16xf32>
    %158 = vector.broadcast %155 : f32 to vector<16x16xf32>
    %159 = arith.mulf %158, %157 : vector<16x16xf32>
    %160 = arith.addf %154, %159 : vector<16x16xf32>
    %c2_135 = arith.constant 2 : index
    %c6_136 = arith.constant 6 : index
    %161 = memref.load %arg2[%c2_135, %c6_136] : memref<4x9xf32, #tpu.memory_space<smem>>
    %c2_137 = arith.constant 2 : index
    %c2_138 = arith.constant 2 : index
    %c0_139 = arith.constant 0 : index
    %162 = vector.load %arg7[%c2_137, %c2_138, %c0_139] : memref<4x18x18xf32, #tpu.memory_space<vmem>>, vector<1x16x16xf32>
    %163 = vector.shape_cast %162 : vector<1x16x16xf32> to vector<16x16xf32>
    %164 = vector.broadcast %161 : f32 to vector<16x16xf32>
    %165 = arith.mulf %164, %163 : vector<16x16xf32>
    %166 = arith.addf %160, %165 : vector<16x16xf32>
    %c2_140 = arith.constant 2 : index
    %c7_141 = arith.constant 7 : index
    %167 = memref.load %arg2[%c2_140, %c7_141] : memref<4x9xf32, #tpu.memory_space<smem>>
    %c2_142 = arith.constant 2 : index
    %c2_143 = arith.constant 2 : index
    %c1_144 = arith.constant 1 : index
    %168 = vector.load %arg7[%c2_142, %c2_143, %c1_144] : memref<4x18x18xf32, #tpu.memory_space<vmem>>, vector<1x16x16xf32>
    %169 = vector.shape_cast %168 : vector<1x16x16xf32> to vector<16x16xf32>
    %170 = vector.broadcast %167 : f32 to vector<16x16xf32>
    %171 = arith.mulf %170, %169 : vector<16x16xf32>
    %172 = arith.addf %166, %171 : vector<16x16xf32>
    %c2_145 = arith.constant 2 : index
    %c8_146 = arith.constant 8 : index
    %173 = memref.load %arg2[%c2_145, %c8_146] : memref<4x9xf32, #tpu.memory_space<smem>>
    %c2_147 = arith.constant 2 : index
    %c2_148 = arith.constant 2 : index
    %c2_149 = arith.constant 2 : index
    %174 = vector.load %arg7[%c2_147, %c2_148, %c2_149] : memref<4x18x18xf32, #tpu.memory_space<vmem>>, vector<1x16x16xf32>
    %175 = vector.shape_cast %174 : vector<1x16x16xf32> to vector<16x16xf32>
    %176 = vector.broadcast %173 : f32 to vector<16x16xf32>
    %177 = arith.mulf %176, %175 : vector<16x16xf32>
    %178 = arith.addf %172, %177 : vector<16x16xf32>
    %c3_150 = arith.constant 3 : index
    %179 = memref.load %arg3[%c3_150] : memref<4xf32, #tpu.memory_space<smem>>
    %180 = vector.broadcast %179 : f32 to vector<16x16xf32>
    %c3_151 = arith.constant 3 : index
    %c0_152 = arith.constant 0 : index
    %181 = memref.load %arg2[%c3_151, %c0_152] : memref<4x9xf32, #tpu.memory_space<smem>>
    %c3_153 = arith.constant 3 : index
    %c0_154 = arith.constant 0 : index
    %c0_155 = arith.constant 0 : index
    %182 = vector.load %arg7[%c3_153, %c0_154, %c0_155] : memref<4x18x18xf32, #tpu.memory_space<vmem>>, vector<1x16x16xf32>
    %183 = vector.shape_cast %182 : vector<1x16x16xf32> to vector<16x16xf32>
    %184 = vector.broadcast %181 : f32 to vector<16x16xf32>
    %185 = arith.mulf %184, %183 : vector<16x16xf32>
    %186 = arith.addf %180, %185 : vector<16x16xf32>
    %c3_156 = arith.constant 3 : index
    %c1_157 = arith.constant 1 : index
    %187 = memref.load %arg2[%c3_156, %c1_157] : memref<4x9xf32, #tpu.memory_space<smem>>
    %c3_158 = arith.constant 3 : index
    %c0_159 = arith.constant 0 : index
    %c1_160 = arith.constant 1 : index
    %188 = vector.load %arg7[%c3_158, %c0_159, %c1_160] : memref<4x18x18xf32, #tpu.memory_space<vmem>>, vector<1x16x16xf32>
    %189 = vector.shape_cast %188 : vector<1x16x16xf32> to vector<16x16xf32>
    %190 = vector.broadcast %187 : f32 to vector<16x16xf32>
    %191 = arith.mulf %190, %189 : vector<16x16xf32>
    %192 = arith.addf %186, %191 : vector<16x16xf32>
    %c3_161 = arith.constant 3 : index
    %c2_162 = arith.constant 2 : index
    %193 = memref.load %arg2[%c3_161, %c2_162] : memref<4x9xf32, #tpu.memory_space<smem>>
    %c3_163 = arith.constant 3 : index
    %c0_164 = arith.constant 0 : index
    %c2_165 = arith.constant 2 : index
    %194 = vector.load %arg7[%c3_163, %c0_164, %c2_165] : memref<4x18x18xf32, #tpu.memory_space<vmem>>, vector<1x16x16xf32>
    %195 = vector.shape_cast %194 : vector<1x16x16xf32> to vector<16x16xf32>
    %196 = vector.broadcast %193 : f32 to vector<16x16xf32>
    %197 = arith.mulf %196, %195 : vector<16x16xf32>
    %198 = arith.addf %192, %197 : vector<16x16xf32>
    %c3_166 = arith.constant 3 : index
    %c3_167 = arith.constant 3 : index
    %199 = memref.load %arg2[%c3_166, %c3_167] : memref<4x9xf32, #tpu.memory_space<smem>>
    %c3_168 = arith.constant 3 : index
    %c1_169 = arith.constant 1 : index
    %c0_170 = arith.constant 0 : index
    %200 = vector.load %arg7[%c3_168, %c1_169, %c0_170] : memref<4x18x18xf32, #tpu.memory_space<vmem>>, vector<1x16x16xf32>
    %201 = vector.shape_cast %200 : vector<1x16x16xf32> to vector<16x16xf32>
    %202 = vector.broadcast %199 : f32 to vector<16x16xf32>
    %203 = arith.mulf %202, %201 : vector<16x16xf32>
    %204 = arith.addf %198, %203 : vector<16x16xf32>
    %c3_171 = arith.constant 3 : index
    %c4_172 = arith.constant 4 : index
    %205 = memref.load %arg2[%c3_171, %c4_172] : memref<4x9xf32, #tpu.memory_space<smem>>
    %c3_173 = arith.constant 3 : index
    %c1_174 = arith.constant 1 : index
    %c1_175 = arith.constant 1 : index
    %206 = vector.load %arg7[%c3_173, %c1_174, %c1_175] : memref<4x18x18xf32, #tpu.memory_space<vmem>>, vector<1x16x16xf32>
    %207 = vector.shape_cast %206 : vector<1x16x16xf32> to vector<16x16xf32>
    %208 = vector.broadcast %205 : f32 to vector<16x16xf32>
    %209 = arith.mulf %208, %207 : vector<16x16xf32>
    %210 = arith.addf %204, %209 : vector<16x16xf32>
    %c3_176 = arith.constant 3 : index
    %c5_177 = arith.constant 5 : index
    %211 = memref.load %arg2[%c3_176, %c5_177] : memref<4x9xf32, #tpu.memory_space<smem>>
    %c3_178 = arith.constant 3 : index
    %c1_179 = arith.constant 1 : index
    %c2_180 = arith.constant 2 : index
    %212 = vector.load %arg7[%c3_178, %c1_179, %c2_180] : memref<4x18x18xf32, #tpu.memory_space<vmem>>, vector<1x16x16xf32>
    %213 = vector.shape_cast %212 : vector<1x16x16xf32> to vector<16x16xf32>
    %214 = vector.broadcast %211 : f32 to vector<16x16xf32>
    %215 = arith.mulf %214, %213 : vector<16x16xf32>
    %216 = arith.addf %210, %215 : vector<16x16xf32>
    %c3_181 = arith.constant 3 : index
    %c6_182 = arith.constant 6 : index
    %217 = memref.load %arg2[%c3_181, %c6_182] : memref<4x9xf32, #tpu.memory_space<smem>>
    %c3_183 = arith.constant 3 : index
    %c2_184 = arith.constant 2 : index
    %c0_185 = arith.constant 0 : index
    %218 = vector.load %arg7[%c3_183, %c2_184, %c0_185] : memref<4x18x18xf32, #tpu.memory_space<vmem>>, vector<1x16x16xf32>
    %219 = vector.shape_cast %218 : vector<1x16x16xf32> to vector<16x16xf32>
    %220 = vector.broadcast %217 : f32 to vector<16x16xf32>
    %221 = arith.mulf %220, %219 : vector<16x16xf32>
    %222 = arith.addf %216, %221 : vector<16x16xf32>
    %c3_186 = arith.constant 3 : index
    %c7_187 = arith.constant 7 : index
    %223 = memref.load %arg2[%c3_186, %c7_187] : memref<4x9xf32, #tpu.memory_space<smem>>
    %c3_188 = arith.constant 3 : index
    %c2_189 = arith.constant 2 : index
    %c1_190 = arith.constant 1 : index
    %224 = vector.load %arg7[%c3_188, %c2_189, %c1_190] : memref<4x18x18xf32, #tpu.memory_space<vmem>>, vector<1x16x16xf32>
    %225 = vector.shape_cast %224 : vector<1x16x16xf32> to vector<16x16xf32>
    %226 = vector.broadcast %223 : f32 to vector<16x16xf32>
    %227 = arith.mulf %226, %225 : vector<16x16xf32>
    %228 = arith.addf %222, %227 : vector<16x16xf32>
    %c3_191 = arith.constant 3 : index
    %c8_192 = arith.constant 8 : index
    %229 = memref.load %arg2[%c3_191, %c8_192] : memref<4x9xf32, #tpu.memory_space<smem>>
    %c3_193 = arith.constant 3 : index
    %c2_194 = arith.constant 2 : index
    %c2_195 = arith.constant 2 : index
    %230 = vector.load %arg7[%c3_193, %c2_194, %c2_195] : memref<4x18x18xf32, #tpu.memory_space<vmem>>, vector<1x16x16xf32>
    %231 = vector.shape_cast %230 : vector<1x16x16xf32> to vector<16x16xf32>
    %232 = vector.broadcast %229 : f32 to vector<16x16xf32>
    %233 = arith.mulf %232, %231 : vector<16x16xf32>
    %234 = arith.addf %228, %233 : vector<16x16xf32>
    %c0_196 = arith.constant 0 : index
    %235 = memref.load %arg5[%c0_196] : memref<8xf32, #tpu.memory_space<smem>>
    %236 = vector.broadcast %235 : f32 to vector<16x16xf32>
    %c0_197 = arith.constant 0 : index
    %c0_198 = arith.constant 0 : index
    %237 = memref.load %arg4[%c0_197, %c0_198] : memref<8x4xf32, #tpu.memory_space<smem>>
    %238 = vector.broadcast %237 : f32 to vector<16x16xf32>
    %239 = arith.mulf %238, %66 : vector<16x16xf32>
    %240 = arith.addf %236, %239 : vector<16x16xf32>
    %c0_199 = arith.constant 0 : index
    %c1_200 = arith.constant 1 : index
    %241 = memref.load %arg4[%c0_199, %c1_200] : memref<8x4xf32, #tpu.memory_space<smem>>
    %242 = vector.broadcast %241 : f32 to vector<16x16xf32>
    %243 = arith.mulf %242, %122 : vector<16x16xf32>
    %244 = arith.addf %240, %243 : vector<16x16xf32>
    %c0_201 = arith.constant 0 : index
    %c2_202 = arith.constant 2 : index
    %245 = memref.load %arg4[%c0_201, %c2_202] : memref<8x4xf32, #tpu.memory_space<smem>>
    %246 = vector.broadcast %245 : f32 to vector<16x16xf32>
    %247 = arith.mulf %246, %178 : vector<16x16xf32>
    %248 = arith.addf %244, %247 : vector<16x16xf32>
    %c0_203 = arith.constant 0 : index
    %c3_204 = arith.constant 3 : index
    %249 = memref.load %arg4[%c0_203, %c3_204] : memref<8x4xf32, #tpu.memory_space<smem>>
    %250 = vector.broadcast %249 : f32 to vector<16x16xf32>
    %251 = arith.mulf %250, %234 : vector<16x16xf32>
    %252 = arith.addf %248, %251 : vector<16x16xf32>
    %c0_205 = arith.constant 0 : index
    %c0_206 = arith.constant 0 : index
    %c0_207 = arith.constant 0 : index
    %c0_208 = arith.constant 0 : index
    %253 = vector.load %arg6[%c0_205, %c0_206, %c0_207, %c0_208] : memref<1x8x16x16xf32, #tpu.memory_space<vmem>>, vector<1x1x16x16xf32>
    %254 = vector.shape_cast %253 : vector<1x1x16x16xf32> to vector<16x16xf32>
    %255 = vector.shape_cast %252 : vector<16x16xf32> to vector<1x1x16x16xf32>
    tpu.vector_store %arg6[%c0_205, %c0_206, %c0_207, %c0_208], %255 {strides = array<i32>} : memref<1x8x16x16xf32, #tpu.memory_space<vmem>>, vector<1x1x16x16xf32>,
    %c1_209 = arith.constant 1 : index
    %256 = memref.load %arg5[%c1_209] : memref<8xf32, #tpu.memory_space<smem>>
    %257 = vector.broadcast %256 : f32 to vector<16x16xf32>
    %c1_210 = arith.constant 1 : index
    %c0_211 = arith.constant 0 : index
    %258 = memref.load %arg4[%c1_210, %c0_211] : memref<8x4xf32, #tpu.memory_space<smem>>
    %259 = vector.broadcast %258 : f32 to vector<16x16xf32>
    %260 = arith.mulf %259, %66 : vector<16x16xf32>
    %261 = arith.addf %257, %260 : vector<16x16xf32>
    %c1_212 = arith.constant 1 : index
    %c1_213 = arith.constant 1 : index
    %262 = memref.load %arg4[%c1_212, %c1_213] : memref<8x4xf32, #tpu.memory_space<smem>>
    %263 = vector.broadcast %262 : f32 to vector<16x16xf32>
    %264 = arith.mulf %263, %122 : vector<16x16xf32>
    %265 = arith.addf %261, %264 : vector<16x16xf32>
    %c1_214 = arith.constant 1 : index
    %c2_215 = arith.constant 2 : index
    %266 = memref.load %arg4[%c1_214, %c2_215] : memref<8x4xf32, #tpu.memory_space<smem>>
    %267 = vector.broadcast %266 : f32 to vector<16x16xf32>
    %268 = arith.mulf %267, %178 : vector<16x16xf32>
    %269 = arith.addf %265, %268 : vector<16x16xf32>
    %c1_216 = arith.constant 1 : index
    %c3_217 = arith.constant 3 : index
    %270 = memref.load %arg4[%c1_216, %c3_217] : memref<8x4xf32, #tpu.memory_space<smem>>
    %271 = vector.broadcast %270 : f32 to vector<16x16xf32>
    %272 = arith.mulf %271, %234 : vector<16x16xf32>
    %273 = arith.addf %269, %272 : vector<16x16xf32>
    %c0_218 = arith.constant 0 : index
    %c1_219 = arith.constant 1 : index
    %c0_220 = arith.constant 0 : index
    %c0_221 = arith.constant 0 : index
    %274 = vector.load %arg6[%c0_218, %c1_219, %c0_220, %c0_221] : memref<1x8x16x16xf32, #tpu.memory_space<vmem>>, vector<1x1x16x16xf32>
    %275 = vector.shape_cast %274 : vector<1x1x16x16xf32> to vector<16x16xf32>
    %276 = vector.shape_cast %273 : vector<16x16xf32> to vector<1x1x16x16xf32>
    tpu.vector_store %arg6[%c0_218, %c1_219, %c0_220, %c0_221], %276 {strides = array<i32>} : memref<1x8x16x16xf32, #tpu.memory_space<vmem>>, vector<1x1x16x16xf32>,
    %c2_222 = arith.constant 2 : index
    %277 = memref.load %arg5[%c2_222] : memref<8xf32, #tpu.memory_space<smem>>
    %278 = vector.broadcast %277 : f32 to vector<16x16xf32>
    %c2_223 = arith.constant 2 : index
    %c0_224 = arith.constant 0 : index
    %279 = memref.load %arg4[%c2_223, %c0_224] : memref<8x4xf32, #tpu.memory_space<smem>>
    %280 = vector.broadcast %279 : f32 to vector<16x16xf32>
    %281 = arith.mulf %280, %66 : vector<16x16xf32>
    %282 = arith.addf %278, %281 : vector<16x16xf32>
    %c2_225 = arith.constant 2 : index
    %c1_226 = arith.constant 1 : index
    %283 = memref.load %arg4[%c2_225, %c1_226] : memref<8x4xf32, #tpu.memory_space<smem>>
    %284 = vector.broadcast %283 : f32 to vector<16x16xf32>
    %285 = arith.mulf %284, %122 : vector<16x16xf32>
    %286 = arith.addf %282, %285 : vector<16x16xf32>
    %c2_227 = arith.constant 2 : index
    %c2_228 = arith.constant 2 : index
    %287 = memref.load %arg4[%c2_227, %c2_228] : memref<8x4xf32, #tpu.memory_space<smem>>
    %288 = vector.broadcast %287 : f32 to vector<16x16xf32>
    %289 = arith.mulf %288, %178 : vector<16x16xf32>
    %290 = arith.addf %286, %289 : vector<16x16xf32>
    %c2_229 = arith.constant 2 : index
    %c3_230 = arith.constant 3 : index
    %291 = memref.load %arg4[%c2_229, %c3_230] : memref<8x4xf32, #tpu.memory_space<smem>>
    %292 = vector.broadcast %291 : f32 to vector<16x16xf32>
    %293 = arith.mulf %292, %234 : vector<16x16xf32>
    %294 = arith.addf %290, %293 : vector<16x16xf32>
    %c0_231 = arith.constant 0 : index
    %c2_232 = arith.constant 2 : index
    %c0_233 = arith.constant 0 : index
    %c0_234 = arith.constant 0 : index
    %295 = vector.load %arg6[%c0_231, %c2_232, %c0_233, %c0_234] : memref<1x8x16x16xf32, #tpu.memory_space<vmem>>, vector<1x1x16x16xf32>
    %296 = vector.shape_cast %295 : vector<1x1x16x16xf32> to vector<16x16xf32>
    %297 = vector.shape_cast %294 : vector<16x16xf32> to vector<1x1x16x16xf32>
    tpu.vector_store %arg6[%c0_231, %c2_232, %c0_233, %c0_234], %297 {strides = array<i32>} : memref<1x8x16x16xf32, #tpu.memory_space<vmem>>, vector<1x1x16x16xf32>,
    %c3_235 = arith.constant 3 : index
    %298 = memref.load %arg5[%c3_235] : memref<8xf32, #tpu.memory_space<smem>>
    %299 = vector.broadcast %298 : f32 to vector<16x16xf32>
    %c3_236 = arith.constant 3 : index
    %c0_237 = arith.constant 0 : index
    %300 = memref.load %arg4[%c3_236, %c0_237] : memref<8x4xf32, #tpu.memory_space<smem>>
    %301 = vector.broadcast %300 : f32 to vector<16x16xf32>
    %302 = arith.mulf %301, %66 : vector<16x16xf32>
    %303 = arith.addf %299, %302 : vector<16x16xf32>
    %c3_238 = arith.constant 3 : index
    %c1_239 = arith.constant 1 : index
    %304 = memref.load %arg4[%c3_238, %c1_239] : memref<8x4xf32, #tpu.memory_space<smem>>
    %305 = vector.broadcast %304 : f32 to vector<16x16xf32>
    %306 = arith.mulf %305, %122 : vector<16x16xf32>
    %307 = arith.addf %303, %306 : vector<16x16xf32>
    %c3_240 = arith.constant 3 : index
    %c2_241 = arith.constant 2 : index
    %308 = memref.load %arg4[%c3_240, %c2_241] : memref<8x4xf32, #tpu.memory_space<smem>>
    %309 = vector.broadcast %308 : f32 to vector<16x16xf32>
    %310 = arith.mulf %309, %178 : vector<16x16xf32>
    %311 = arith.addf %307, %310 : vector<16x16xf32>
    %c3_242 = arith.constant 3 : index
    %c3_243 = arith.constant 3 : index
    %312 = memref.load %arg4[%c3_242, %c3_243] : memref<8x4xf32, #tpu.memory_space<smem>>
    %313 = vector.broadcast %312 : f32 to vector<16x16xf32>
    %314 = arith.mulf %313, %234 : vector<16x16xf32>
    %315 = arith.addf %311, %314 : vector<16x16xf32>
    %c0_244 = arith.constant 0 : index
    %c3_245 = arith.constant 3 : index
    %c0_246 = arith.constant 0 : index
    %c0_247 = arith.constant 0 : index
    %316 = vector.load %arg6[%c0_244, %c3_245, %c0_246, %c0_247] : memref<1x8x16x16xf32, #tpu.memory_space<vmem>>, vector<1x1x16x16xf32>
    %317 = vector.shape_cast %316 : vector<1x1x16x16xf32> to vector<16x16xf32>
    %318 = vector.shape_cast %315 : vector<16x16xf32> to vector<1x1x16x16xf32>
    tpu.vector_store %arg6[%c0_244, %c3_245, %c0_246, %c0_247], %318 {strides = array<i32>} : memref<1x8x16x16xf32, #tpu.memory_space<vmem>>, vector<1x1x16x16xf32>,
    %c4_248 = arith.constant 4 : index
    %319 = memref.load %arg5[%c4_248] : memref<8xf32, #tpu.memory_space<smem>>
    %320 = vector.broadcast %319 : f32 to vector<16x16xf32>
    %c4_249 = arith.constant 4 : index
    %c0_250 = arith.constant 0 : index
    %321 = memref.load %arg4[%c4_249, %c0_250] : memref<8x4xf32, #tpu.memory_space<smem>>
    %322 = vector.broadcast %321 : f32 to vector<16x16xf32>
    %323 = arith.mulf %322, %66 : vector<16x16xf32>
    %324 = arith.addf %320, %323 : vector<16x16xf32>
    %c4_251 = arith.constant 4 : index
    %c1_252 = arith.constant 1 : index
    %325 = memref.load %arg4[%c4_251, %c1_252] : memref<8x4xf32, #tpu.memory_space<smem>>
    %326 = vector.broadcast %325 : f32 to vector<16x16xf32>
    %327 = arith.mulf %326, %122 : vector<16x16xf32>
    %328 = arith.addf %324, %327 : vector<16x16xf32>
    %c4_253 = arith.constant 4 : index
    %c2_254 = arith.constant 2 : index
    %329 = memref.load %arg4[%c4_253, %c2_254] : memref<8x4xf32, #tpu.memory_space<smem>>
    %330 = vector.broadcast %329 : f32 to vector<16x16xf32>
    %331 = arith.mulf %330, %178 : vector<16x16xf32>
    %332 = arith.addf %328, %331 : vector<16x16xf32>
    %c4_255 = arith.constant 4 : index
    %c3_256 = arith.constant 3 : index
    %333 = memref.load %arg4[%c4_255, %c3_256] : memref<8x4xf32, #tpu.memory_space<smem>>
    %334 = vector.broadcast %333 : f32 to vector<16x16xf32>
    %335 = arith.mulf %334, %234 : vector<16x16xf32>
    %336 = arith.addf %332, %335 : vector<16x16xf32>
    %c0_257 = arith.constant 0 : index
    %c4_258 = arith.constant 4 : index
    %c0_259 = arith.constant 0 : index
    %c0_260 = arith.constant 0 : index
    %337 = vector.load %arg6[%c0_257, %c4_258, %c0_259, %c0_260] : memref<1x8x16x16xf32, #tpu.memory_space<vmem>>, vector<1x1x16x16xf32>
    %338 = vector.shape_cast %337 : vector<1x1x16x16xf32> to vector<16x16xf32>
    %339 = vector.shape_cast %336 : vector<16x16xf32> to vector<1x1x16x16xf32>
    tpu.vector_store %arg6[%c0_257, %c4_258, %c0_259, %c0_260], %339 {strides = array<i32>} : memref<1x8x16x16xf32, #tpu.memory_space<vmem>>, vector<1x1x16x16xf32>,
    %c5_261 = arith.constant 5 : index
    %340 = memref.load %arg5[%c5_261] : memref<8xf32, #tpu.memory_space<smem>>
    %341 = vector.broadcast %340 : f32 to vector<16x16xf32>
    %c5_262 = arith.constant 5 : index
    %c0_263 = arith.constant 0 : index
    %342 = memref.load %arg4[%c5_262, %c0_263] : memref<8x4xf32, #tpu.memory_space<smem>>
    %343 = vector.broadcast %342 : f32 to vector<16x16xf32>
    %344 = arith.mulf %343, %66 : vector<16x16xf32>
    %345 = arith.addf %341, %344 : vector<16x16xf32>
    %c5_264 = arith.constant 5 : index
    %c1_265 = arith.constant 1 : index
    %346 = memref.load %arg4[%c5_264, %c1_265] : memref<8x4xf32, #tpu.memory_space<smem>>
    %347 = vector.broadcast %346 : f32 to vector<16x16xf32>
    %348 = arith.mulf %347, %122 : vector<16x16xf32>
    %349 = arith.addf %345, %348 : vector<16x16xf32>
    %c5_266 = arith.constant 5 : index
    %c2_267 = arith.constant 2 : index
    %350 = memref.load %arg4[%c5_266, %c2_267] : memref<8x4xf32, #tpu.memory_space<smem>>
    %351 = vector.broadcast %350 : f32 to vector<16x16xf32>
    %352 = arith.mulf %351, %178 : vector<16x16xf32>
    %353 = arith.addf %349, %352 : vector<16x16xf32>
    %c5_268 = arith.constant 5 : index
    %c3_269 = arith.constant 3 : index
    %354 = memref.load %arg4[%c5_268, %c3_269] : memref<8x4xf32, #tpu.memory_space<smem>>
    %355 = vector.broadcast %354 : f32 to vector<16x16xf32>
    %356 = arith.mulf %355, %234 : vector<16x16xf32>
    %357 = arith.addf %353, %356 : vector<16x16xf32>
    %c0_270 = arith.constant 0 : index
    %c5_271 = arith.constant 5 : index
    %c0_272 = arith.constant 0 : index
    %c0_273 = arith.constant 0 : index
    %358 = vector.load %arg6[%c0_270, %c5_271, %c0_272, %c0_273] : memref<1x8x16x16xf32, #tpu.memory_space<vmem>>, vector<1x1x16x16xf32>
    %359 = vector.shape_cast %358 : vector<1x1x16x16xf32> to vector<16x16xf32>
    %360 = vector.shape_cast %357 : vector<16x16xf32> to vector<1x1x16x16xf32>
    tpu.vector_store %arg6[%c0_270, %c5_271, %c0_272, %c0_273], %360 {strides = array<i32>} : memref<1x8x16x16xf32, #tpu.memory_space<vmem>>, vector<1x1x16x16xf32>,
    %c6_274 = arith.constant 6 : index
    %361 = memref.load %arg5[%c6_274] : memref<8xf32, #tpu.memory_space<smem>>
    %362 = vector.broadcast %361 : f32 to vector<16x16xf32>
    %c6_275 = arith.constant 6 : index
    %c0_276 = arith.constant 0 : index
    %363 = memref.load %arg4[%c6_275, %c0_276] : memref<8x4xf32, #tpu.memory_space<smem>>
    %364 = vector.broadcast %363 : f32 to vector<16x16xf32>
    %365 = arith.mulf %364, %66 : vector<16x16xf32>
    %366 = arith.addf %362, %365 : vector<16x16xf32>
    %c6_277 = arith.constant 6 : index
    %c1_278 = arith.constant 1 : index
    %367 = memref.load %arg4[%c6_277, %c1_278] : memref<8x4xf32, #tpu.memory_space<smem>>
    %368 = vector.broadcast %367 : f32 to vector<16x16xf32>
    %369 = arith.mulf %368, %122 : vector<16x16xf32>
    %370 = arith.addf %366, %369 : vector<16x16xf32>
    %c6_279 = arith.constant 6 : index
    %c2_280 = arith.constant 2 : index
    %371 = memref.load %arg4[%c6_279, %c2_280] : memref<8x4xf32, #tpu.memory_space<smem>>
    %372 = vector.broadcast %371 : f32 to vector<16x16xf32>
    %373 = arith.mulf %372, %178 : vector<16x16xf32>
    %374 = arith.addf %370, %373 : vector<16x16xf32>
    %c6_281 = arith.constant 6 : index
    %c3_282 = arith.constant 3 : index
    %375 = memref.load %arg4[%c6_281, %c3_282] : memref<8x4xf32, #tpu.memory_space<smem>>
    %376 = vector.broadcast %375 : f32 to vector<16x16xf32>
    %377 = arith.mulf %376, %234 : vector<16x16xf32>
    %378 = arith.addf %374, %377 : vector<16x16xf32>
    %c0_283 = arith.constant 0 : index
    %c6_284 = arith.constant 6 : index
    %c0_285 = arith.constant 0 : index
    %c0_286 = arith.constant 0 : index
    %379 = vector.load %arg6[%c0_283, %c6_284, %c0_285, %c0_286] : memref<1x8x16x16xf32, #tpu.memory_space<vmem>>, vector<1x1x16x16xf32>
    %380 = vector.shape_cast %379 : vector<1x1x16x16xf32> to vector<16x16xf32>
    %381 = vector.shape_cast %378 : vector<16x16xf32> to vector<1x1x16x16xf32>
    tpu.vector_store %arg6[%c0_283, %c6_284, %c0_285, %c0_286], %381 {strides = array<i32>} : memref<1x8x16x16xf32, #tpu.memory_space<vmem>>, vector<1x1x16x16xf32>,
    %c7_287 = arith.constant 7 : index
    %382 = memref.load %arg5[%c7_287] : memref<8xf32, #tpu.memory_space<smem>>
    %383 = vector.broadcast %382 : f32 to vector<16x16xf32>
    %c7_288 = arith.constant 7 : index
    %c0_289 = arith.constant 0 : index
    %384 = memref.load %arg4[%c7_288, %c0_289] : memref<8x4xf32, #tpu.memory_space<smem>>
    %385 = vector.broadcast %384 : f32 to vector<16x16xf32>
    %386 = arith.mulf %385, %66 : vector<16x16xf32>
    %387 = arith.addf %383, %386 : vector<16x16xf32>
    %c7_290 = arith.constant 7 : index
    %c1_291 = arith.constant 1 : index
    %388 = memref.load %arg4[%c7_290, %c1_291] : memref<8x4xf32, #tpu.memory_space<smem>>
    %389 = vector.broadcast %388 : f32 to vector<16x16xf32>
    %390 = arith.mulf %389, %122 : vector<16x16xf32>
    %391 = arith.addf %387, %390 : vector<16x16xf32>
    %c7_292 = arith.constant 7 : index
    %c2_293 = arith.constant 2 : index
    %392 = memref.load %arg4[%c7_292, %c2_293] : memref<8x4xf32, #tpu.memory_space<smem>>
    %393 = vector.broadcast %392 : f32 to vector<16x16xf32>
    %394 = arith.mulf %393, %178 : vector<16x16xf32>
    %395 = arith.addf %391, %394 : vector<16x16xf32>
    %c7_294 = arith.constant 7 : index
    %c3_295 = arith.constant 3 : index
    %396 = memref.load %arg4[%c7_294, %c3_295] : memref<8x4xf32, #tpu.memory_space<smem>>
    %397 = vector.broadcast %396 : f32 to vector<16x16xf32>
    %398 = arith.mulf %397, %234 : vector<16x16xf32>
    %399 = arith.addf %395, %398 : vector<16x16xf32>
    %c0_296 = arith.constant 0 : index
    %c7_297 = arith.constant 7 : index
    %c0_298 = arith.constant 0 : index
    %c0_299 = arith.constant 0 : index
    %400 = vector.load %arg6[%c0_296, %c7_297, %c0_298, %c0_299] : memref<1x8x16x16xf32, #tpu.memory_space<vmem>>, vector<1x1x16x16xf32>
    %401 = vector.shape_cast %400 : vector<1x1x16x16xf32> to vector<16x16xf32>
    %402 = vector.shape_cast %399 : vector<16x16xf32> to vector<1x1x16x16xf32>
    tpu.vector_store %arg6[%c0_296, %c7_297, %c0_298, %c0_299], %402 {strides = array<i32>} : memref<1x8x16x16xf32, #tpu.memory_space<vmem>>, vector<1x1x16x16xf32>,
    return
  }
  func.func @transform_0(%arg0: i32) -> (i32, i32, i32, i32) {
    %c0_i32 = arith.constant 0 : i32
    %c0_i32_0 = arith.constant 0 : i32
    %c0_i32_1 = arith.constant 0 : i32
    %c0_i32_2 = arith.constant 0 : i32
    return %arg0, %c0_i32, %c0_i32_0, %c0_i32_1 : i32, i32, i32, i32
  }
  func.func @transform_1(%arg0: i32) -> (i32, i32) {
    %c0_i32 = arith.constant 0 : i32
    %c0_i32_0 = arith.constant 0 : i32
    %c0_i32_1 = arith.constant 0 : i32
    return %c0_i32, %c0_i32_0 : i32, i32
  }
  func.func @transform_2(%arg0: i32) -> i32 {
    %c0_i32 = arith.constant 0 : i32
    %c0_i32_0 = arith.constant 0 : i32
    return %c0_i32 : i32
  }
  func.func @transform_3(%arg0: i32) -> (i32, i32) {
    %c0_i32 = arith.constant 0 : i32
    %c0_i32_0 = arith.constant 0 : i32
    %c0_i32_1 = arith.constant 0 : i32
    return %c0_i32, %c0_i32_0 : i32, i32
  }
  func.func @transform_4(%arg0: i32) -> i32 {
    %c0_i32 = arith.constant 0 : i32
    %c0_i32_0 = arith.constant 0 : i32
    return %c0_i32 : i32
  }
  func.func @transform_5(%arg0: i32) -> (i32, i32, i32, i32) {
    %c0_i32 = arith.constant 0 : i32
    %c0_i32_0 = arith.constant 0 : i32
    %c0_i32_1 = arith.constant 0 : i32
    %c0_i32_2 = arith.constant 0 : i32
    return %arg0, %c0_i32, %c0_i32_0, %c0_i32_1 : i32, i32, i32, i32
  }
}

</mosaic_0001>

<llo_original>
// kernel: depthwise_separable_conv.1
$region0: #{depthwise_separable_conv.1}
  #allocation0 [shape = 'u32[]', space=smem, size = 0x4, offset = 0x4, fixed_abs, tag = 'smem constant byte address 0x4 - core index']
  #allocation1 [shape = 'u32[144,128]{1,0:T(1,128)}', space=vmem, size = 0x12000, scoped, tag = 'internal scratch']
  #allocation2 [shape = 'f32[4,18,18]{2,1,0:T(8,128)}', space=vmem, size = 0xc000, scoped, tag = 'scratch operand']
  %s0 = inlined_call_operand.hbm [shape: f32[2,4,16,16], index: 0, kind: input, shape index: {}]
  %s1 = inlined_call_operand.vmem [shape: f32[4,9], index: 1, kind: input, shape index: {}]
  %s2 = inlined_call_operand.vmem [shape: f32[4], index: 2, kind: input, shape index: {}]
  %s3 = inlined_call_operand.vmem [shape: f32[8,4], index: 3, kind: input, shape index: {}]
  %s4 = inlined_call_operand.vmem [shape: f32[8], index: 4, kind: input, shape index: {}]
  %s5 = inlined_call_operand.hbm [shape: f32[2,8,16,16], index: 5, kind: output, shape index: {}]
  %s6 = sld [smem:[#allocation0]]
  $region73: #{depthwise_separable_conv.1} parent=0
    _
  %s8 = ssub.s32 1, %s6
  %s9 = scalar_select 0, %s8, %s6
  $region1: #{depthwise_separable_conv.1} parent=0
    #allocation3 [shape = 'u8[65536]{0}', space=vmem, size = 0x10000, scoped, tag = 'input window, operand 0']
    #allocation4 [shape = 's32[2]{0}', space=sflag, size = 0x8, scoped, tag = 'scoped memory for depthwise_separable_conv.1']
    #allocation5 [shape = 's32[2]{0}', space=sflag, size = 0x8, scoped, tag = 'scoped memory for depthwise_separable_conv.1']
    #allocation6 [shape = 's32[2]{0}', space=sflag, size = 0x8, scoped, tag = 'scoped memory for depthwise_separable_conv.1']
    #allocation7 [shape = 'u8[2048]{0}', space=smem, size = 0x800, scoped, tag = 'input window, operand 1, single buffered']
    #allocation8 [shape = 'u8[512]{0}', space=smem, size = 0x200, scoped, tag = 'input window, operand 2, single buffered']
    #allocation9 [shape = 's32[1]{0}', space=sflag, size = 0x4, scoped, tag = 'scoped memory for depthwise_separable_conv.1']
    #allocation10 [shape = 'u8[4096]{0}', space=smem, size = 0x1000, scoped, tag = 'input window, operand 3, single buffered']
    #allocation11 [shape = 'u8[512]{0}', space=smem, size = 0x200, scoped, tag = 'input window, operand 4, single buffered']
    #allocation12 [shape = 's32[1]{0}', space=sflag, size = 0x4, scoped, tag = 'scoped memory for depthwise_separable_conv.1']
    #allocation13 [shape = 'u8[131072]{0}', space=vmem, size = 0x20000, scoped, tag = 'output window, operand 0']
    %10 = vsyncpa [#allocation4], 0
    %s11 = scalar_lea.sflag [#allocation4], 1
    %12 = vsyncpa %s11, 0
    %13 = vsyncpa [#allocation6], 0
    %14 = vsyncpa [#allocation9], 0
    %15 = vsyncpa [#allocation12], 0
    %16 = vsyncpa [#allocation5], 0
    %s17 = scalar_lea.sflag [#allocation5], 1
    %18 = vsyncpa %s17, 0
    loop: start=0, step=1, limit=4
    $region2: #{depthwise_separable_conv.1} parent=1 // loop_pre_header
      _
    $region3: #{depthwise_separable_conv.1} parent=1 // loop_header
      %s20 = sphi 0, %s24
      %p21 = scmp.ge.s32.totalorder %s20, 4
      %s30 = sphi 0, %s32
      %s33 = sphi 0, %s30
      %s34 = sphi 0, %s33
      %s50 = sphi 0, %s34
      %s54 = sphi 0, %s54
      %s56 = sphi 0, %s54
      %s57 = sphi 0, %s56
      %s71 = sphi 0, %s57
      %s75 = sphi 0, %s75
      %s77 = sphi 0, %s75
      %s78 = sphi 0, %s77
      %s92 = sphi 0, %s78
      %s96 = sphi 0, %s96
      %s98 = sphi 0, %s96
      %s99 = sphi 0, %s98
      %s113 = sphi 0, %s99
      %s117 = sphi 0, %s117
      %s119 = sphi 0, %s117
      %s120 = sphi 0, %s119
      %s134 = sphi 0, %s120
      %s140 = sphi 0, %s142
      %s143 = sphi 0, %s140
      %s144 = sphi 0, %s143
      %s160 = sphi 0, %s144
    $region4: #{depthwise_separable_conv.1} parent=1 // loop_header_branch
      %23 = sbr.rel (%p21) target = $region8
    $region5: #{depthwise_separable_conv.1} parent=1 // loop_body
      %s25 = ssub.s32 %s20, 1
      %s26 = ssub.s32 %s20, 2
      %s27 = sadd.s32 %s20, 1
      %s28 = ssub.s32 %s20, %s27
      %p29 = scmp.eq.s32.totalorder %s28, 0
      %s31 = sadd.s32 %s30, 1
      %s32 = scalar_select %p29, %s30, %s31
      %p35 = pneg %p29
      %p36 = scmp.eq.s32.totalorder %s20, 1
      %p37 = por %p35, %p36
      %p38 = scmp.ne.s32.totalorder %s30, %s33
      %p39 = scmp.eq.s32.totalorder %s20, 0
      %p40 = por %p38, %p39
      %p41 = scmp.ne.s32.totalorder %s30, %s33
      %p42 = scmp.eq.s32.totalorder %s25, 1
      %p43 = por %p41, %p42
      %p44 = scmp.ne.s32.totalorder %s33, %s34
      %p45 = scmp.eq.s32.totalorder %s25, 0
      %p46 = por %p44, %p45
      %p47 = scmp.ne.s32.totalorder %s33, %s34
      %p48 = scmp.eq.s32.totalorder %s26, 1
      %p49 = por %p47, %p48
      %p51 = scmp.ne.s32.totalorder %s34, %s50
      %p52 = scmp.eq.s32.totalorder %s26, 0
      %p53 = por %p51, %p52
      %s55 = sadd.s32 %s54, 1
      %p58 = scmp.eq.s32.totalorder %s20, 1
      %p59 = scmp.ne.s32.totalorder %s54, %s56
      %p60 = scmp.eq.s32.totalorder %s20, 0
      %p61 = por %p59, %p60
      %p62 = scmp.ne.s32.totalorder %s54, %s56
      %p63 = scmp.eq.s32.totalorder %s25, 1
      %p64 = por %p62, %p63
      %p65 = scmp.ne.s32.totalorder %s56, %s57
      %p66 = scmp.eq.s32.totalorder %s25, 0
      %p67 = por %p65, %p66
      %p68 = scmp.ne.s32.totalorder %s56, %s57
      %p69 = scmp.eq.s32.totalorder %s26, 1
      %p70 = por %p68, %p69
      %p72 = scmp.ne.s32.totalorder %s57, %s71
      %p73 = scmp.eq.s32.totalorder %s26, 0
      %p74 = por %p72, %p73
      %s76 = sadd.s32 %s75, 1
      %p79 = scmp.eq.s32.totalorder %s20, 1
      %p80 = scmp.ne.s32.totalorder %s75, %s77
      %p81 = scmp.eq.s32.totalorder %s20, 0
      %p82 = por %p80, %p81
      %p83 = scmp.ne.s32.totalorder %s75, %s77
      %p84 = scmp.eq.s32.totalorder %s25, 1
      %p85 = por %p83, %p84
      %p86 = scmp.ne.s32.totalorder %s77, %s78
      %p87 = scmp.eq.s32.totalorder %s25, 0
      %p88 = por %p86, %p87
      %p89 = scmp.ne.s32.totalorder %s77, %s78
      %p90 = scmp.eq.s32.totalorder %s26, 1
      %p91 = por %p89, %p90
      %p93 = scmp.ne.s32.totalorder %s78, %s92
      %p94 = scmp.eq.s32.totalorder %s26, 0
      %p95 = por %p93, %p94
      %s97 = sadd.s32 %s96, 1
      %p100 = scmp.eq.s32.totalorder %s20, 1
      %p101 = scmp.ne.s32.totalorder %s96, %s98
      %p102 = scmp.eq.s32.totalorder %s20, 0
      %p103 = por %p101, %p102
      %p104 = scmp.ne.s32.totalorder %s96, %s98
      %p105 = scmp.eq.s32.totalorder %s25, 1
      %p106 = por %p104, %p105
      %p107 = scmp.ne.s32.totalorder %s98, %s99
      %p108 = scmp.eq.s32.totalorder %s25, 0
      %p109 = por %p107, %p108
      %p110 = scmp.ne.s32.totalorder %s98, %s99
      %p111 = scmp.eq.s32.totalorder %s26, 1
      %p112 = por %p110, %p111
      %p114 = scmp.ne.s32.totalorder %s99, %s113
      %p115 = scmp.eq.s32.totalorder %s26, 0
      %p116 = por %p114, %p115
      %s118 = sadd.s32 %s117, 1
      %p121 = scmp.eq.s32.totalorder %s20, 1
      %p122 = scmp.ne.s32.totalorder %s117, %s119
      %p123 = scmp.eq.s32.totalorder %s20, 0
      %p124 = por %p122, %p123
      %p125 = scmp.ne.s32.totalorder %s117, %s119
      %p126 = scmp.eq.s32.totalorder %s25, 1
      %p127 = por %p125, %p126
      %p128 = scmp.ne.s32.totalorder %s119, %s120
      %p129 = scmp.eq.s32.totalorder %s25, 0
      %p130 = por %p128, %p129
      %p131 = scmp.ne.s32.totalorder %s119, %s120
      %p132 = scmp.eq.s32.totalorder %s26, 1
      %p133 = por %p131, %p132
      %p135 = scmp.ne.s32.totalorder %s120, %s134
      %p136 = scmp.eq.s32.totalorder %s26, 0
      %p137 = por %p135, %p136
      %s138 = ssub.s32 %s20, %s27
      %p139 = scmp.eq.s32.totalorder %s138, 0
      %s141 = sadd.s32 %s140, 1
      %s142 = scalar_select %p139, %s140, %s141
      %p145 = pneg %p139
      %p146 = scmp.eq.s32.totalorder %s20, 1
      %p147 = por %p145, %p146
      %p148 = scmp.ne.s32.totalorder %s140, %s143
      %p149 = scmp.eq.s32.totalorder %s20, 0
      %p150 = por %p148, %p149
      %p151 = scmp.ne.s32.totalorder %s140, %s143
      %p152 = scmp.eq.s32.totalorder %s25, 1
      %p153 = por %p151, %p152
      %p154 = scmp.ne.s32.totalorder %s143, %s144
      %p155 = scmp.eq.s32.totalorder %s25, 0
      %p156 = por %p154, %p155
      %p157 = scmp.ne.s32.totalorder %s143, %s144
      %p158 = scmp.eq.s32.totalorder %s26, 1
      %p159 = por %p157, %p158
      %p161 = scmp.ne.s32.totalorder %s144, %s160
      %p162 = scmp.eq.s32.totalorder %s26, 0
      %p163 = por %p161, %p162
      %p164 = scmp.le.s32.totalorder 1, %s20
      %p165 = scmp.lt.s32.totalorder %s20, 3
      %p166 = pnand %p164, %p165
      %p167 = pneg %p166
      // Predicated region
      $region9: #{depthwise_separable_conv.1} parent=5 // pred_check
        _
      $region10: #{depthwise_separable_conv.1} parent=5 // pred_check_branch
        %169 = sbr.rel (%p166) target = $region12
      $region11: #{depthwise_separable_conv.1} parent=5 // pred_region
        %s170 = ssub.s32 %s20, 1
        // Predicated region
        $region13: #{depthwise_separable_conv.1} parent=11 // pred_check
          %p171 = pneg %p67
        $region14: #{depthwise_separable_conv.1} parent=11 // pred_check_branch
          %173 = sbr.rel (%p171) target = $region16
        $region15: #{depthwise_separable_conv.1} parent=11 // pred_region
          %s175 = ssub.s32 64, 64
          %176 = vsyncadd [#allocation6], %s175
          %s178 = sshll.u32 %s1, 4
          %s179 = int_to_ptr.vmem [resolvable:$true] %s178
          %181 = dma.vmem_to_smem %s179, 64, [#allocation7], [#allocation6]
        $region16: #{depthwise_separable_conv.1} parent=11 // pred_fallthru
          _
        // Predicated region
        $region17: #{depthwise_separable_conv.1} parent=11 // pred_check
          %p182 = pneg %p88
        $region18: #{depthwise_separable_conv.1} parent=11 // pred_check_branch
          %184 = sbr.rel (%p182) target = $region20
        $region19: #{depthwise_separable_conv.1} parent=11 // pred_region
          %s186 = ssub.s32 16, 16
          %187 = vsyncadd [#allocation9], %s186
          %s189 = sshll.u32 %s2, 4
          %s190 = int_to_ptr.vmem [resolvable:$true] %s189
          %192 = dma.vmem_to_smem %s190, 16, [#allocation8], [#allocation9]
        $region20: #{depthwise_separable_conv.1} parent=11 // pred_fallthru
          _
        // Predicated region
        $region21: #{depthwise_separable_conv.1} parent=11 // pred_check
          %p193 = pneg %p109
        $region22: #{depthwise_separable_conv.1} parent=11 // pred_check_branch
          %195 = sbr.rel (%p193) target = $region24
        $region23: #{depthwise_separable_conv.1} parent=11 // pred_region
          %s197 = ssub.s32 128, 128
          %198 = vsyncadd [#allocation9], %s197
          %s200 = sshll.u32 %s3, 4
          %s201 = int_to_ptr.vmem [resolvable:$true] %s200
          %203 = dma.vmem_to_smem %s201, 128, [#allocation10], [#allocation9]
        $region24: #{depthwise_separable_conv.1} parent=11 // pred_fallthru
          _
        // Predicated region
        $region25: #{depthwise_separable_conv.1} parent=11 // pred_check
          %p204 = pneg %p130
        $region26: #{depthwise_separable_conv.1} parent=11 // pred_check_branch
          %206 = sbr.rel (%p204) target = $region28
        $region27: #{depthwise_separable_conv.1} parent=11 // pred_region
          %s208 = ssub.s32 16, 16
          %209 = vsyncadd [#allocation12], %s208
          %s211 = sshll.u32 %s4, 4
          %s212 = int_to_ptr.vmem [resolvable:$true] %s211
          %214 = dma.vmem_to_smem %s212, 16, [#allocation11], [#allocation12]
        $region28: #{depthwise_separable_conv.1} parent=11 // pred_fallthru
          _
      $region12: #{depthwise_separable_conv.1} parent=5 // pred_fallthru
        _
      %p215 = scmp.lt.s32.totalorder %s20, 2
      // Predicated region
      $region29: #{depthwise_separable_conv.1} parent=5 // pred_check
        %p216 = pneg %p215
      $region30: #{depthwise_separable_conv.1} parent=5 // pred_check_branch
        %218 = sbr.rel (%p216) target = $region32
      $region31: #{depthwise_separable_conv.1} parent=5 // pred_region
        // Predicated region
        $region33: #{depthwise_separable_conv.1} parent=31 // pred_check
          %p219 = pneg %p40
        $region34: #{depthwise_separable_conv.1} parent=31 // pred_check_branch
          %221 = sbr.rel (%p219) target = $region36
        $region35: #{depthwise_separable_conv.1} parent=31 // pred_region
          %s222 = sand.u32 %s30, 1
          %s223 = scalar_lea.sflag [#allocation4], %s222
          %s224 = sand.u32 %s30, 1
          %s225 = smul.addr %s224, 64
          %s226 = scalar_lea.vmem [#allocation3], %s225
          %s228 = ssub.s32 1024, 1024
          %229 = vsyncadd %s223, %s228
          %s230 = smul.addr %s20, 8
          %s231 = smul.addr %s230, 128
          %s232 = scalar_lea.hbm %s0, %s231
          %s233 = sshll.u32 %s226, 4
          %s234 = int_to_ptr.vmem [resolvable:$true] %s233
          %239 = dma.hbm_to_vmem [thread:$0]  %s232, 1024, %s234, %s223, 128, 128, 8
        $region36: #{depthwise_separable_conv.1} parent=31 // pred_fallthru
          _
      $region32: #{depthwise_separable_conv.1} parent=5 // pred_fallthru
        _
      %p240 = scmp.le.s32.totalorder 1, %s20
      %p241 = scmp.lt.s32.totalorder %s20, 3
      %p242 = pnand %p240, %p241
      %p243 = pneg %p242
      // Predicated region
      $region37: #{depthwise_separable_conv.1} parent=5 // pred_check
        _
      $region38: #{depthwise_separable_conv.1} parent=5 // pred_check_branch
        %245 = sbr.rel (%p242) target = $region40
      $region39: #{depthwise_separable_conv.1} parent=5 // pred_region
        %s246 = ssub.s32 %s20, 1
        %s247 = sand.u32 %s33, 1
        %s248 = scalar_lea.sflag [#allocation4], %s247
        %s249 = sand.u32 %s33, 1
        %s250 = smul.addr %s249, 64
        %s251 = scalar_lea.vmem [#allocation3], %s250
        // Predicated region
        $region41: #{depthwise_separable_conv.1} parent=39 // pred_check
          %p252 = pneg %p46
        $region42: #{depthwise_separable_conv.1} parent=39 // pred_check_branch
          %254 = sbr.rel (%p252) target = $region44
        $region43: #{depthwise_separable_conv.1} parent=39 // pred_region
          %255 = dma.done %s248, 1024
        $region44: #{depthwise_separable_conv.1} parent=39 // pred_fallthru
          _
        // Predicated region
        $region45: #{depthwise_separable_conv.1} parent=39 // pred_check
          %p256 = pneg %p67
        $region46: #{depthwise_separable_conv.1} parent=39 // pred_check_branch
          %258 = sbr.rel (%p256) target = $region48
        $region47: #{depthwise_separable_conv.1} parent=39 // pred_region
          %259 = dma.done [#allocation6], 64
        $region48: #{depthwise_separable_conv.1} parent=39 // pred_fallthru
          _
        // Predicated region
        $region49: #{depthwise_separable_conv.1} parent=39 // pred_check
          %p260 = pneg %p88
        $region50: #{depthwise_separable_conv.1} parent=39 // pred_check_branch
          %262 = sbr.rel (%p260) target = $region52
        $region51: #{depthwise_separable_conv.1} parent=39 // pred_region
          %263 = dma.done [#allocation9], 16
        $region52: #{depthwise_separable_conv.1} parent=39 // pred_fallthru
          _
        // Predicated region
        $region53: #{depthwise_separable_conv.1} parent=39 // pred_check
          %p264 = pneg %p109
        $region54: #{depthwise_separable_conv.1} parent=39 // pred_check_branch
          %266 = sbr.rel (%p264) target = $region56
        $region55: #{depthwise_separable_conv.1} parent=39 // pred_region
          %267 = dma.done [#allocation9], 128
        $region56: #{depthwise_separable_conv.1} parent=39 // pred_fallthru
          _
        // Predicated region
        $region57: #{depthwise_separable_conv.1} parent=39 // pred_check
          %p268 = pneg %p130
        $region58: #{depthwise_separable_conv.1} parent=39 // pred_check_branch
          %270 = sbr.rel (%p268) target = $region60
        $region59: #{depthwise_separable_conv.1} parent=39 // pred_region
          %271 = dma.done [#allocation12], 16
        $region60: #{depthwise_separable_conv.1} parent=39 // pred_fallthru
          _
        %272 = sfence
        %s273 = sand.u32 %s33, 1
        %s274 = scalar_lea.sflag [#allocation4], %s273
        %s275 = sand.u32 %s33, 1
        %s276 = smul.addr %s275, 64
        %s277 = scalar_lea.vmem [#allocation3], %s276
        %p278 = pneg %p46
        %p279 = pneg %p43
        %p280 = pneg %p67
        %p281 = pneg %p64
        %p282 = pneg %p88
        %p283 = pneg %p85
        %p284 = pneg %p109
        %p285 = pneg %p106
        %p286 = pneg %p130
        %p287 = pneg %p127
        %p288 = pneg %p156
        %p289 = pneg %p153
        %s290 = sand.u32 %s143, 1
        %s291 = scalar_lea.sflag [#allocation5], %s290
        %s292 = sand.u32 %s143, 1
        %s293 = smul.addr %s292, 128
        %s294 = scalar_lea.vmem [#allocation13], %s293
        %vm295 = vcmask 139264
        %296 = vst.msk [vmem:[#allocation2] sm:$0x1] %vm295, 0.0
        %297 = vst.msk [vmem:[#allocation2 + $0x18] sm:$0x1] %vm295, 0.0
        %298 = vst.msk [vmem:[#allocation2 + $0x30] sm:$0x1] %vm295, 0.0
        %299 = vst.msk [vmem:[#allocation2 + $0x48] sm:$0x1] %vm295, 0.0
        %300 = vst.msk [vmem:[#allocation2 + $0x11] sm:$0x1] %vm295, 0.0
        %301 = vst.msk [vmem:[#allocation2 + $0x29] sm:$0x1] %vm295, 0.0
        %302 = vst.msk [vmem:[#allocation2 + $0x41] sm:$0x1] %vm295, 0.0
        %303 = vst.msk [vmem:[#allocation2 + $0x59] sm:$0x1] %vm295, 0.0
        %vm304 = vcmask 7168
        %305 = vst.msk [vmem:[#allocation2] sm:$0xff] %vm304, 0.0
        %306 = vst.msk [vmem:[#allocation2 + $0x8] sm:$0xff] %vm304, 0.0
        %vm307 = vcmask 1024
        %308 = vst.msk [vmem:[#allocation2 + $0x10] sm:$0x3] %vm307, 0.0
        %309 = vst.msk [vmem:[#allocation2 + $0x18] sm:$0xff] %vm304, 0.0
        %310 = vst.msk [vmem:[#allocation2 + $0x20] sm:$0xff] %vm304, 0.0
        %311 = vst.msk [vmem:[#allocation2 + $0x28] sm:$0x3] %vm307, 0.0
        %312 = vst.msk [vmem:[#allocation2 + $0x30] sm:$0xff] %vm304, 0.0
        %313 = vst.msk [vmem:[#allocation2 + $0x38] sm:$0xff] %vm304, 0.0
        %314 = vst.msk [vmem:[#allocation2 + $0x40] sm:$0x3] %vm307, 0.0
        %315 = vst.msk [vmem:[#allocation2 + $0x48] sm:$0xff] %vm304, 0.0
        %316 = vst.msk [vmem:[#allocation2 + $0x50] sm:$0xff] %vm304, 0.0
        %317 = vst.msk [vmem:[#allocation2 + $0x58] sm:$0x3] %vm307, 0.0
        %vm318 = vcmask 146568
        %319 = vst.msk [vmem:[#allocation2] sm:$0xff] %vm318, 0.0
        %320 = vst.msk [vmem:[#allocation2 + $0x8] sm:$0xff] %vm318, 0.0
        %vm321 = vcmask 140424
        %322 = vst.msk [vmem:[#allocation2 + $0x10] sm:$0x3] %vm321, 0.0
        %323 = vst.msk [vmem:[#allocation2 + $0x18] sm:$0xff] %vm318, 0.0
        %324 = vst.msk [vmem:[#allocation2 + $0x20] sm:$0xff] %vm318, 0.0
        %325 = vst.msk [vmem:[#allocation2 + $0x28] sm:$0x3] %vm321, 0.0
        %326 = vst.msk [vmem:[#allocation2 + $0x30] sm:$0xff] %vm318, 0.0
        %327 = vst.msk [vmem:[#allocation2 + $0x38] sm:$0xff] %vm318, 0.0
        %328 = vst.msk [vmem:[#allocation2 + $0x40] sm:$0x3] %vm321, 0.0
        %329 = vst.msk [vmem:[#allocation2 + $0x48] sm:$0xff] %vm318, 0.0
        %330 = vst.msk [vmem:[#allocation2 + $0x50] sm:$0xff] %vm318, 0.0
        %331 = vst.msk [vmem:[#allocation2 + $0x58] sm:$0x3] %vm321, 0.0
        %v332 = vld [vmem:[%s251] sm:$0xff]
        %v333 = vld [vmem:[%s251 + $0x8] sm:$0xff]
        %v334 = vld [vmem:[%s251 + $0x10] sm:$0xff]
        %v335 = vld [vmem:[%s251 + $0x18] sm:$0xff]
        %v336 = vld [vmem:[%s251 + $0x20] sm:$0xff]
        %v337 = vld [vmem:[%s251 + $0x28] sm:$0xff]
        %v338 = vld [vmem:[%s251 + $0x30] sm:$0xff]
        %v339 = vld [vmem:[%s251 + $0x38] sm:$0xff]
        %348 = vrot.lane.b32.xlu0 %v332, 1
        %v349 = vpop.permute.xlu0 %348
        %350 = vrot.lane.b32.xlu0 %v333, 1
        %v351 = vpop.permute.xlu0 %350
        %352 = vrot.lane.b32.xlu0 %v334, 1
        %v353 = vpop.permute.xlu0 %352
        %354 = vrot.lane.b32.xlu0 %v335, 1
        %v355 = vpop.permute.xlu0 %354
        %356 = vrot.lane.b32.xlu0 %v336, 1
        %v357 = vpop.permute.xlu0 %356
        %358 = vrot.lane.b32.xlu0 %v337, 1
        %v359 = vpop.permute.xlu0 %358
        %360 = vrot.lane.b32.xlu0 %v338, 1
        %v361 = vpop.permute.xlu0 %360
        %362 = vrot.lane.b32.xlu0 %v339, 1
        %v363 = vpop.permute.xlu0 %362
        %vm372 = vcmask 138248
        %373 = vst.msk [vmem:[#allocation2 + $0x1] sm:$0xff] %vm372, %v349
        %374 = vst.msk [vmem:[#allocation2 + $0x9] sm:$0xff] %vm372, %v351
        %375 = vst.msk [vmem:[#allocation2 + $0x19] sm:$0xff] %vm372, %v353
        %376 = vst.msk [vmem:[#allocation2 + $0x21] sm:$0xff] %vm372, %v355
        %377 = vst.msk [vmem:[#allocation2 + $0x31] sm:$0xff] %vm372, %v357
        %378 = vst.msk [vmem:[#allocation2 + $0x39] sm:$0xff] %vm372, %v359
        %379 = vst.msk [vmem:[#allocation2 + $0x49] sm:$0xff] %vm372, %v361
        %380 = vst.msk [vmem:[#allocation2 + $0x51] sm:$0xff] %vm372, %v363
        %s381 = sld [smem:[#allocation8]]
        %v382 = vstv %s381
        %s383 = sld [smem:[#allocation7]]
        %v384 = vld [vmem:[#allocation2] sm:$0xff]
        %v385 = vld [vmem:[#allocation2 + $0x8] sm:$0xff]
        %v386 = vstv %s383
        %v387 = vmul.f32 %v386, %v384
        %v388 = vmul.f32 %v386, %v385
        %v389 = vadd.f32 %v382, %v387
        %v390 = vadd.f32 %v382, %v388
        %s391 = sld [smem:[#allocation7 + $0x1]]
        %v392 = vstv %s391
        %v393 = vmul.f32 %v392, %v384
        %v394 = vmul.f32 %v392, %v385
        %397 = vrot.lane.b32.xlu0 %v393, 127
        %v398 = vpop.permute.xlu0 %397
        %399 = vrot.lane.b32.xlu0 %v394, 127
        %v400 = vpop.permute.xlu0 %399
        %v403 = vadd.f32 %v389, %v398
        %v404 = vadd.f32 %v390, %v400
        %s405 = sld [smem:[#allocation7 + $0x2]]
        %v406 = vstv %s405
        %v407 = vmul.f32 %v406, %v384
        %v408 = vmul.f32 %v406, %v385
        %411 = vrot.lane.b32.xlu0 %v407, 126
        %v412 = vpop.permute.xlu0 %411
        %413 = vrot.lane.b32.xlu0 %v408, 126
        %v414 = vpop.permute.xlu0 %413
        %v417 = vadd.f32 %v403, %v412
        %v418 = vadd.f32 %v404, %v414
        %s419 = sld [smem:[#allocation7 + $0x3]]
        %v420 = vld [vmem:[#allocation2 + $0x1] sm:$0xff]
        %v421 = vld [vmem:[#allocation2 + $0x9] sm:$0xff]
        %v422 = vstv %s419
        %v423 = vmul.f32 %v422, %v420
        %v424 = vmul.f32 %v422, %v421
        %v425 = vadd.f32 %v417, %v423
        %v426 = vadd.f32 %v418, %v424
        %s427 = sld [smem:[#allocation7 + $0x4]]
        %v428 = vstv %s427
        %v429 = vmul.f32 %v428, %v420
        %v430 = vmul.f32 %v428, %v421
        %433 = vrot.lane.b32.xlu0 %v429, 127
        %v434 = vpop.permute.xlu0 %433
        %435 = vrot.lane.b32.xlu0 %v430, 127
        %v436 = vpop.permute.xlu0 %435
        %v439 = vadd.f32 %v425, %v434
        %v440 = vadd.f32 %v426, %v436
        %s441 = sld [smem:[#allocation7 + $0x5]]
        %v442 = vstv %s441
        %v443 = vmul.f32 %v442, %v420
        %v444 = vmul.f32 %v442, %v421
        %447 = vrot.lane.b32.xlu0 %v443, 126
        %v448 = vpop.permute.xlu0 %447
        %449 = vrot.lane.b32.xlu0 %v444, 126
        %v450 = vpop.permute.xlu0 %449
        %v453 = vadd.f32 %v439, %v448
        %v454 = vadd.f32 %v440, %v450
        %s455 = sld [smem:[#allocation7 + $0x6]]
        %v456 = vld [vmem:[#allocation2 + $0x2] sm:$0xff]
        %v457 = vld [vmem:[#allocation2 + $0xa] sm:$0xff]
        %v458 = vstv %s455
        %v459 = vmul.f32 %v458, %v456
        %v460 = vmul.f32 %v458, %v457
        %v461 = vadd.f32 %v453, %v459
        %v462 = vadd.f32 %v454, %v460
        %s463 = sld [smem:[#allocation7 + $0x7]]
        %v464 = vstv %s463
        %v465 = vmul.f32 %v464, %v456
        %v466 = vmul.f32 %v464, %v457
        %469 = vrot.lane.b32.xlu0 %v465, 127
        %v470 = vpop.permute.xlu0 %469
        %471 = vrot.lane.b32.xlu0 %v466, 127
        %v472 = vpop.permute.xlu0 %471
        %v475 = vadd.f32 %v461, %v470
        %v476 = vadd.f32 %v462, %v472
        %s477 = sld [smem:[#allocation7 + $0x8]]
        %v478 = vstv %s477
        %v479 = vmul.f32 %v478, %v456
        %v480 = vmul.f32 %v478, %v457
        %483 = vrot.lane.b32.xlu0 %v479, 126
        %v484 = vpop.permute.xlu0 %483
        %485 = vrot.lane.b32.xlu0 %v480, 126
        %v486 = vpop.permute.xlu0 %485
        %v489 = vadd.f32 %v475, %v484
        %v490 = vadd.f32 %v476, %v486
        %s491 = sld [smem:[#allocation8 + $0x1]]
        %v492 = vstv %s491
        %s493 = sld [smem:[#allocation7 + $0x80]]
        %s494 = scalar_lea.vmem [#allocation2], 24
        %v495 = vld [vmem:[%s494] sm:$0xff]
        %v496 = vld [vmem:[%s494 + $0x8] sm:$0xff]
        %v497 = vstv %s493
        %v498 = vmul.f32 %v497, %v495
        %v499 = vmul.f32 %v497, %v496
        %v500 = vadd.f32 %v492, %v498
        %v501 = vadd.f32 %v492, %v499
        %s502 = sld [smem:[#allocation7 + $0x81]]
        %v503 = vstv %s502
        %v504 = vmul.f32 %v503, %v495
        %v505 = vmul.f32 %v503, %v496
        %508 = vrot.lane.b32.xlu0 %v504, 127
        %v509 = vpop.permute.xlu0 %508
        %510 = vrot.lane.b32.xlu0 %v505, 127
        %v511 = vpop.permute.xlu0 %510
        %v514 = vadd.f32 %v500, %v509
        %v515 = vadd.f32 %v501, %v511
        %s516 = sld [smem:[#allocation7 + $0x82]]
        %v517 = vstv %s516
        %v518 = vmul.f32 %v517, %v495
        %v519 = vmul.f32 %v517, %v496
        %522 = vrot.lane.b32.xlu0 %v518, 126
        %v523 = vpop.permute.xlu0 %522
        %524 = vrot.lane.b32.xlu0 %v519, 126
        %v525 = vpop.permute.xlu0 %524
        %v528 = vadd.f32 %v514, %v523
        %v529 = vadd.f32 %v515, %v525
        %s530 = sld [smem:[#allocation7 + $0x83]]
        %v531 = vld [vmem:[%s494 + $0x1] sm:$0xff]
        %v532 = vld [vmem:[%s494 + $0x9] sm:$0xff]
        %v533 = vstv %s530
        %v534 = vmul.f32 %v533, %v531
        %v535 = vmul.f32 %v533, %v532
        %v536 = vadd.f32 %v528, %v534
        %v537 = vadd.f32 %v529, %v535
        %s538 = sld [smem:[#allocation7 + $0x84]]
        %v539 = vstv %s538
        %v540 = vmul.f32 %v539, %v531
        %v541 = vmul.f32 %v539, %v532
        %544 = vrot.lane.b32.xlu0 %v540, 127
        %v545 = vpop.permute.xlu0 %544
        %546 = vrot.lane.b32.xlu0 %v541, 127
        %v547 = vpop.permute.xlu0 %546
        %v550 = vadd.f32 %v536, %v545
        %v551 = vadd.f32 %v537, %v547
        %s552 = sld [smem:[#allocation7 + $0x85]]
        %v553 = vstv %s552
        %v554 = vmul.f32 %v553, %v531
        %v555 = vmul.f32 %v553, %v532
        %558 = vrot.lane.b32.xlu0 %v554, 126
        %v559 = vpop.permute.xlu0 %558
        %560 = vrot.lane.b32.xlu0 %v555, 126
        %v561 = vpop.permute.xlu0 %560
        %v564 = vadd.f32 %v550, %v559
        %v565 = vadd.f32 %v551, %v561
        %s566 = sld [smem:[#allocation7 + $0x86]]
        %v567 = vld [vmem:[%s494 + $0x2] sm:$0xff]
        %v568 = vld [vmem:[%s494 + $0xa] sm:$0xff]
        %v569 = vstv %s566
        %v570 = vmul.f32 %v569, %v567
        %v571 = vmul.f32 %v569, %v568
        %v572 = vadd.f32 %v564, %v570
        %v573 = vadd.f32 %v565, %v571
        %s574 = sld [smem:[#allocation7 + $0x87]]
        %v575 = vstv %s574
        %v576 = vmul.f32 %v575, %v567
        %v577 = vmul.f32 %v575, %v568
        %580 = vrot.lane.b32.xlu0 %v576, 127
        %v581 = vpop.permute.xlu0 %580
        %582 = vrot.lane.b32.xlu0 %v577, 127
        %v583 = vpop.permute.xlu0 %582
        %v586 = vadd.f32 %v572, %v581
        %v587 = vadd.f32 %v573, %v583
        %s588 = sld [smem:[#allocation7 + $0x88]]
        %v589 = vstv %s588
        %v590 = vmul.f32 %v589, %v567
        %v591 = vmul.f32 %v589, %v568
        %594 = vrot.lane.b32.xlu0 %v590, 126
        %v595 = vpop.permute.xlu0 %594
        %596 = vrot.lane.b32.xlu0 %v591, 126
        %v597 = vpop.permute.xlu0 %596
        %v600 = vadd.f32 %v586, %v595
        %v601 = vadd.f32 %v587, %v597
        %s602 = sld [smem:[#allocation8 + $0x2]]
        %v603 = vstv %s602
        %s604 = sld [smem:[#allocation7 + $0x100]]
        %s605 = scalar_lea.vmem [#allocation2], 48
        %v606 = vld [vmem:[%s605] sm:$0xff]
        %v607 = vld [vmem:[%s605 + $0x8] sm:$0xff]
        %v608 = vstv %s604
        %v609 = vmul.f32 %v608, %v606
        %v610 = vmul.f32 %v608, %v607
        %v611 = vadd.f32 %v603, %v609
        %v612 = vadd.f32 %v603, %v610
        %s613 = sld [smem:[#allocation7 + $0x101]]
        %v614 = vstv %s613
        %v615 = vmul.f32 %v614, %v606
        %v616 = vmul.f32 %v614, %v607
        %619 = vrot.lane.b32.xlu0 %v615, 127
        %v620 = vpop.permute.xlu0 %619
        %621 = vrot.lane.b32.xlu0 %v616, 127
        %v622 = vpop.permute.xlu0 %621
        %v625 = vadd.f32 %v611, %v620
        %v626 = vadd.f32 %v612, %v622
        %s627 = sld [smem:[#allocation7 + $0x102]]
        %v628 = vstv %s627
        %v629 = vmul.f32 %v628, %v606
        %v630 = vmul.f32 %v628, %v607
        %633 = vrot.lane.b32.xlu0 %v629, 126
        %v634 = vpop.permute.xlu0 %633
        %635 = vrot.lane.b32.xlu0 %v630, 126
        %v636 = vpop.permute.xlu0 %635
        %v639 = vadd.f32 %v625, %v634
        %v640 = vadd.f32 %v626, %v636
        %s641 = sld [smem:[#allocation7 + $0x103]]
        %v642 = vld [vmem:[%s605 + $0x1] sm:$0xff]
        %v643 = vld [vmem:[%s605 + $0x9] sm:$0xff]
        %v644 = vstv %s641
        %v645 = vmul.f32 %v644, %v642
        %v646 = vmul.f32 %v644, %v643
        %v647 = vadd.f32 %v639, %v645
        %v648 = vadd.f32 %v640, %v646
        %s649 = sld [smem:[#allocation7 + $0x104]]
        %v650 = vstv %s649
        %v651 = vmul.f32 %v650, %v642
        %v652 = vmul.f32 %v650, %v643
        %655 = vrot.lane.b32.xlu0 %v651, 127
        %v656 = vpop.permute.xlu0 %655
        %657 = vrot.lane.b32.xlu0 %v652, 127
        %v658 = vpop.permute.xlu0 %657
        %v661 = vadd.f32 %v647, %v656
        %v662 = vadd.f32 %v648, %v658
        %s663 = sld [smem:[#allocation7 + $0x105]]
        %v664 = vstv %s663
        %v665 = vmul.f32 %v664, %v642
        %v666 = vmul.f32 %v664, %v643
        %669 = vrot.lane.b32.xlu0 %v665, 126
        %v670 = vpop.permute.xlu0 %669
        %671 = vrot.lane.b32.xlu0 %v666, 126
        %v672 = vpop.permute.xlu0 %671
        %v675 = vadd.f32 %v661, %v670
        %v676 = vadd.f32 %v662, %v672
        %s677 = sld [smem:[#allocation7 + $0x106]]
        %v678 = vld [vmem:[%s605 + $0x2] sm:$0xff]
        %v679 = vld [vmem:[%s605 + $0xa] sm:$0xff]
        %v680 = vstv %s677
        %v681 = vmul.f32 %v680, %v678
        %v682 = vmul.f32 %v680, %v679
        %v683 = vadd.f32 %v675, %v681
        %v684 = vadd.f32 %v676, %v682
        %s685 = sld [smem:[#allocation7 + $0x107]]
        %v686 = vstv %s685
        %v687 = vmul.f32 %v686, %v678
        %v688 = vmul.f32 %v686, %v679
        %691 = vrot.lane.b32.xlu0 %v687, 127
        %v692 = vpop.permute.xlu0 %691
        %693 = vrot.lane.b32.xlu0 %v688, 127
        %v694 = vpop.permute.xlu0 %693
        %v697 = vadd.f32 %v683, %v692
        %v698 = vadd.f32 %v684, %v694
        %s699 = sld [smem:[#allocation7 + $0x108]]
        %v700 = vstv %s699
        %v701 = vmul.f32 %v700, %v678
        %v702 = vmul.f32 %v700, %v679
        %705 = vrot.lane.b32.xlu0 %v701, 126
        %v706 = vpop.permute.xlu0 %705
        %707 = vrot.lane.b32.xlu0 %v702, 126
        %v708 = vpop.permute.xlu0 %707
        %v711 = vadd.f32 %v697, %v706
        %v712 = vadd.f32 %v698, %v708
        %s713 = sld [smem:[#allocation8 + $0x3]]
        %v714 = vstv %s713
        %s715 = sld [smem:[#allocation7 + $0x180]]
        %s716 = scalar_lea.vmem [#allocation2], 72
        %v717 = vld [vmem:[%s716] sm:$0xff]
        %v718 = vld [vmem:[%s716 + $0x8] sm:$0xff]
        %v719 = vstv %s715
        %v720 = vmul.f32 %v719, %v717
        %v721 = vmul.f32 %v719, %v718
        %v722 = vadd.f32 %v714, %v720
        %v723 = vadd.f32 %v714, %v721
        %s724 = sld [smem:[#allocation7 + $0x181]]
        %v725 = vstv %s724
        %v726 = vmul.f32 %v725, %v717
        %v727 = vmul.f32 %v725, %v718
        %730 = vrot.lane.b32.xlu0 %v726, 127
        %v731 = vpop.permute.xlu0 %730
        %732 = vrot.lane.b32.xlu0 %v727, 127
        %v733 = vpop.permute.xlu0 %732
        %v736 = vadd.f32 %v722, %v731
        %v737 = vadd.f32 %v723, %v733
        %s738 = sld [smem:[#allocation7 + $0x182]]
        %v739 = vstv %s738
        %v740 = vmul.f32 %v739, %v717
        %v741 = vmul.f32 %v739, %v718
        %744 = vrot.lane.b32.xlu0 %v740, 126
        %v745 = vpop.permute.xlu0 %744
        %746 = vrot.lane.b32.xlu0 %v741, 126
        %v747 = vpop.permute.xlu0 %746
        %v750 = vadd.f32 %v736, %v745
        %v751 = vadd.f32 %v737, %v747
        %s752 = sld [smem:[#allocation7 + $0x183]]
        %v753 = vld [vmem:[%s716 + $0x1] sm:$0xff]
        %v754 = vld [vmem:[%s716 + $0x9] sm:$0xff]
        %v755 = vstv %s752
        %v756 = vmul.f32 %v755, %v753
        %v757 = vmul.f32 %v755, %v754
        %v758 = vadd.f32 %v750, %v756
        %v759 = vadd.f32 %v751, %v757
        %s760 = sld [smem:[#allocation7 + $0x184]]
        %v761 = vstv %s760
        %v762 = vmul.f32 %v761, %v753
        %v763 = vmul.f32 %v761, %v754
        %766 = vrot.lane.b32.xlu0 %v762, 127
        %v767 = vpop.permute.xlu0 %766
        %768 = vrot.lane.b32.xlu0 %v763, 127
        %v769 = vpop.permute.xlu0 %768
        %v772 = vadd.f32 %v758, %v767
        %v773 = vadd.f32 %v759, %v769
        %s774 = sld [smem:[#allocation7 + $0x185]]
        %v775 = vstv %s774
        %v776 = vmul.f32 %v775, %v753
        %v777 = vmul.f32 %v775, %v754
        %780 = vrot.lane.b32.xlu0 %v776, 126
        %v781 = vpop.permute.xlu0 %780
        %782 = vrot.lane.b32.xlu0 %v777, 126
        %v783 = vpop.permute.xlu0 %782
        %v786 = vadd.f32 %v772, %v781
        %v787 = vadd.f32 %v773, %v783
        %s788 = sld [smem:[#allocation7 + $0x186]]
        %v789 = vld [vmem:[%s716 + $0x2] sm:$0xff]
        %v790 = vld [vmem:[%s716 + $0xa] sm:$0xff]
        %v791 = vstv %s788
        %v792 = vmul.f32 %v791, %v789
        %v793 = vmul.f32 %v791, %v790
        %v794 = vadd.f32 %v786, %v792
        %v795 = vadd.f32 %v787, %v793
        %s796 = sld [smem:[#allocation7 + $0x187]]
        %v797 = vstv %s796
        %v798 = vmul.f32 %v797, %v789
        %v799 = vmul.f32 %v797, %v790
        %802 = vrot.lane.b32.xlu0 %v798, 127
        %v803 = vpop.permute.xlu0 %802
        %804 = vrot.lane.b32.xlu0 %v799, 127
        %v805 = vpop.permute.xlu0 %804
        %v808 = vadd.f32 %v794, %v803
        %v809 = vadd.f32 %v795, %v805
        %s810 = sld [smem:[#allocation7 + $0x188]]
        %v811 = vstv %s810
        %v812 = vmul.f32 %v811, %v789
        %v813 = vmul.f32 %v811, %v790
        %816 = vrot.lane.b32.xlu0 %v812, 126
        %v817 = vpop.permute.xlu0 %816
        %818 = vrot.lane.b32.xlu0 %v813, 126
        %v819 = vpop.permute.xlu0 %818
        %v822 = vadd.f32 %v808, %v817
        %v823 = vadd.f32 %v809, %v819
        %s824 = sld [smem:[#allocation11]]
        %v825 = vstv %s824
        %s826 = sld [smem:[#allocation10]]
        %v827 = vstv %s826
        %v828 = vmul.f32 %v827, %v489
        %v829 = vmul.f32 %v827, %v490
        %v830 = vadd.f32 %v825, %v828
        %v831 = vadd.f32 %v825, %v829
        %s832 = sld [smem:[#allocation10 + $0x1]]
        %v833 = vstv %s832
        %v834 = vmul.f32 %v833, %v600
        %v835 = vmul.f32 %v833, %v601
        %v836 = vadd.f32 %v830, %v834
        %v837 = vadd.f32 %v831, %v835
        %s838 = sld [smem:[#allocation10 + $0x2]]
        %v839 = vstv %s838
        %v840 = vmul.f32 %v839, %v711
        %v841 = vmul.f32 %v839, %v712
        %v842 = vadd.f32 %v836, %v840
        %v843 = vadd.f32 %v837, %v841
        %s844 = sld [smem:[#allocation10 + $0x3]]
        %v845 = vstv %s844
        %v846 = vmul.f32 %v845, %v822
        %v847 = vmul.f32 %v845, %v823
        %v848 = vadd.f32 %v842, %v846
        %v849 = vadd.f32 %v843, %v847
        %vm850 = vcmask 130048
        %851 = vst.msk [vmem:[%s294] sm:$0xff] %vm850, %v848
        %852 = vst.msk [vmem:[%s294 + $0x8] sm:$0xff] %vm850, %v849
        %s853 = sld [smem:[#allocation11 + $0x1]]
        %v854 = vstv %s853
        %s855 = sld [smem:[#allocation10 + $0x80]]
        %v856 = vstv %s855
        %v857 = vmul.f32 %v856, %v489
        %v858 = vmul.f32 %v856, %v490
        %v859 = vadd.f32 %v854, %v857
        %v860 = vadd.f32 %v854, %v858
        %s861 = sld [smem:[#allocation10 + $0x81]]
        %v862 = vstv %s861
        %v863 = vmul.f32 %v862, %v600
        %v864 = vmul.f32 %v862, %v601
        %v865 = vadd.f32 %v859, %v863
        %v866 = vadd.f32 %v860, %v864
        %s867 = sld [smem:[#allocation10 + $0x82]]
        %v868 = vstv %s867
        %v869 = vmul.f32 %v868, %v711
        %v870 = vmul.f32 %v868, %v712
        %v871 = vadd.f32 %v865, %v869
        %v872 = vadd.f32 %v866, %v870
        %s873 = sld [smem:[#allocation10 + $0x83]]
        %v874 = vstv %s873
        %v875 = vmul.f32 %v874, %v822
        %v876 = vmul.f32 %v874, %v823
        %v877 = vadd.f32 %v871, %v875
        %v878 = vadd.f32 %v872, %v876
        %s879 = scalar_lea.vmem %s294, 16 [#allocation13]
        %880 = vst.msk [vmem:[%s879] sm:$0xff] %vm850, %v877
        %881 = vst.msk [vmem:[%s879 + $0x8] sm:$0xff] %vm850, %v878
        %s882 = sld [smem:[#allocation11 + $0x2]]
        %v883 = vstv %s882
        %s884 = sld [smem:[#allocation10 + $0x100]]
        %v885 = vstv %s884
        %v886 = vmul.f32 %v885, %v489
        %v887 = vmul.f32 %v885, %v490
        %v888 = vadd.f32 %v883, %v886
        %v889 = vadd.f32 %v883, %v887
        %s890 = sld [smem:[#allocation10 + $0x101]]
        %v891 = vstv %s890
        %v892 = vmul.f32 %v891, %v600
        %v893 = vmul.f32 %v891, %v601
        %v894 = vadd.f32 %v888, %v892
        %v895 = vadd.f32 %v889, %v893
        %s896 = sld [smem:[#allocation10 + $0x102]]
        %v897 = vstv %s896
        %v898 = vmul.f32 %v897, %v711
        %v899 = vmul.f32 %v897, %v712
        %v900 = vadd.f32 %v894, %v898
        %v901 = vadd.f32 %v895, %v899
        %s902 = sld [smem:[#allocation10 + $0x103]]
        %v903 = vstv %s902
        %v904 = vmul.f32 %v903, %v822
        %v905 = vmul.f32 %v903, %v823
        %v906 = vadd.f32 %v900, %v904
        %v907 = vadd.f32 %v901, %v905
        %s908 = scalar_lea.vmem %s294, 32 [#allocation13]
        %909 = vst.msk [vmem:[%s908] sm:$0xff] %vm850, %v906
        %910 = vst.msk [vmem:[%s908 + $0x8] sm:$0xff] %vm850, %v907
        %s911 = sld [smem:[#allocation11 + $0x3]]
        %v912 = vstv %s911
        %s913 = sld [smem:[#allocation10 + $0x180]]
        %v914 = vstv %s913
        %v915 = vmul.f32 %v914, %v489
        %v916 = vmul.f32 %v914, %v490
        %v917 = vadd.f32 %v912, %v915
        %v918 = vadd.f32 %v912, %v916
        %s919 = sld [smem:[#allocation10 + $0x181]]
        %v920 = vstv %s919
        %v921 = vmul.f32 %v920, %v600
        %v922 = vmul.f32 %v920, %v601
        %v923 = vadd.f32 %v917, %v921
        %v924 = vadd.f32 %v918, %v922
        %s925 = sld [smem:[#allocation10 + $0x182]]
        %v926 = vstv %s925
        %v927 = vmul.f32 %v926, %v711
        %v928 = vmul.f32 %v926, %v712
        %v929 = vadd.f32 %v923, %v927
        %v930 = vadd.f32 %v924, %v928
        %s931 = sld [smem:[#allocation10 + $0x183]]
        %v932 = vstv %s931
        %v933 = vmul.f32 %v932, %v822
        %v934 = vmul.f32 %v932, %v823
        %v935 = vadd.f32 %v929, %v933
        %v936 = vadd.f32 %v930, %v934
        %s937 = scalar_lea.vmem %s294, 48 [#allocation13]
        %938 = vst.msk [vmem:[%s937] sm:$0xff] %vm850, %v935
        %939 = vst.msk [vmem:[%s937 + $0x8] sm:$0xff] %vm850, %v936
        %s940 = sld [smem:[#allocation11 + $0x4]]
        %v941 = vstv %s940
        %s942 = sld [smem:[#allocation10 + $0x200]]
        %v943 = vstv %s942
        %v944 = vmul.f32 %v943, %v489
        %v945 = vmul.f32 %v943, %v490
        %v946 = vadd.f32 %v941, %v944
        %v947 = vadd.f32 %v941, %v945
        %s948 = sld [smem:[#allocation10 + $0x201]]
        %v949 = vstv %s948
        %v950 = vmul.f32 %v949, %v600
        %v951 = vmul.f32 %v949, %v601
        %v952 = vadd.f32 %v946, %v950
        %v953 = vadd.f32 %v947, %v951
        %s954 = sld [smem:[#allocation10 + $0x202]]
        %v955 = vstv %s954
        %v956 = vmul.f32 %v955, %v711
        %v957 = vmul.f32 %v955, %v712
        %v958 = vadd.f32 %v952, %v956
        %v959 = vadd.f32 %v953, %v957
        %s960 = sld [smem:[#allocation10 + $0x203]]
        %v961 = vstv %s960
        %v962 = vmul.f32 %v961, %v822
        %v963 = vmul.f32 %v961, %v823
        %v964 = vadd.f32 %v958, %v962
        %v965 = vadd.f32 %v959, %v963
        %s966 = scalar_lea.vmem %s294, 64 [#allocation13]
        %967 = vst.msk [vmem:[%s966] sm:$0xff] %vm850, %v964
        %968 = vst.msk [vmem:[%s966 + $0x8] sm:$0xff] %vm850, %v965
        %s969 = sld [smem:[#allocation11 + $0x5]]
        %v970 = vstv %s969
        %s971 = sld [smem:[#allocation10 + $0x280]]
        %v972 = vstv %s971
        %v973 = vmul.f32 %v972, %v489
        %v974 = vmul.f32 %v972, %v490
        %v975 = vadd.f32 %v970, %v973
        %v976 = vadd.f32 %v970, %v974
        %s977 = sld [smem:[#allocation10 + $0x281]]
        %v978 = vstv %s977
        %v979 = vmul.f32 %v978, %v600
        %v980 = vmul.f32 %v978, %v601
        %v981 = vadd.f32 %v975, %v979
        %v982 = vadd.f32 %v976, %v980
        %s983 = sld [smem:[#allocation10 + $0x282]]
        %v984 = vstv %s983
        %v985 = vmul.f32 %v984, %v711
        %v986 = vmul.f32 %v984, %v712
        %v987 = vadd.f32 %v981, %v985
        %v988 = vadd.f32 %v982, %v986
        %s989 = sld [smem:[#allocation10 + $0x283]]
        %v990 = vstv %s989
        %v991 = vmul.f32 %v990, %v822
        %v992 = vmul.f32 %v990, %v823
        %v993 = vadd.f32 %v987, %v991
        %v994 = vadd.f32 %v988, %v992
        %s995 = scalar_lea.vmem %s294, 80 [#allocation13]
        %996 = vst.msk [vmem:[%s995] sm:$0xff] %vm850, %v993
        %997 = vst.msk [vmem:[%s995 + $0x8] sm:$0xff] %vm850, %v994
        %s998 = sld [smem:[#allocation11 + $0x6]]
        %v999 = vstv %s998
        %s1000 = sld [smem:[#allocation10 + $0x300]]
        %v1001 = vstv %s1000
        %v1002 = vmul.f32 %v1001, %v489
        %v1003 = vmul.f32 %v1001, %v490
        %v1004 = vadd.f32 %v999, %v1002
        %v1005 = vadd.f32 %v999, %v1003
        %s1006 = sld [smem:[#allocation10 + $0x301]]
        %v1007 = vstv %s1006
        %v1008 = vmul.f32 %v1007, %v600
        %v1009 = vmul.f32 %v1007, %v601
        %v1010 = vadd.f32 %v1004, %v1008
        %v1011 = vadd.f32 %v1005, %v1009
        %s1012 = sld [smem:[#allocation10 + $0x302]]
        %v1013 = vstv %s1012
        %v1014 = vmul.f32 %v1013, %v711
        %v1015 = vmul.f32 %v1013, %v712
        %v1016 = vadd.f32 %v1010, %v1014
        %v1017 = vadd.f32 %v1011, %v1015
        %s1018 = sld [smem:[#allocation10 + $0x303]]
        %v1019 = vstv %s1018
        %v1020 = vmul.f32 %v1019, %v822
        %v1021 = vmul.f32 %v1019, %v823
        %v1022 = vadd.f32 %v1016, %v1020
        %v1023 = vadd.f32 %v1017, %v1021
        %s1024 = scalar_lea.vmem %s294, 96 [#allocation13]
        %1025 = vst.msk [vmem:[%s1024] sm:$0xff] %vm850, %v1022
        %1026 = vst.msk [vmem:[%s1024 + $0x8] sm:$0xff] %vm850, %v1023
        %s1027 = sld [smem:[#allocation11 + $0x7]]
        %v1028 = vstv %s1027
        %s1029 = sld [smem:[#allocation10 + $0x380]]
        %v1030 = vstv %s1029
        %v1031 = vmul.f32 %v1030, %v489
        %v1032 = vmul.f32 %v1030, %v490
        %v1033 = vadd.f32 %v1028, %v1031
        %v1034 = vadd.f32 %v1028, %v1032
        %s1035 = sld [smem:[#allocation10 + $0x381]]
        %v1036 = vstv %s1035
        %v1037 = vmul.f32 %v1036, %v600
        %v1038 = vmul.f32 %v1036, %v601
        %v1039 = vadd.f32 %v1033, %v1037
        %v1040 = vadd.f32 %v1034, %v1038
        %s1041 = sld [smem:[#allocation10 + $0x382]]
        %v1042 = vstv %s1041
        %v1043 = vmul.f32 %v1042, %v711
        %v1044 = vmul.f32 %v1042, %v712
        %v1045 = vadd.f32 %v1039, %v1043
        %v1046 = vadd.f32 %v1040, %v1044
        %s1047 = sld [smem:[#allocation10 + $0x383]]
        %v1048 = vstv %s1047
        %v1049 = vmul.f32 %v1048, %v822
        %v1050 = vmul.f32 %v1048, %v823
        %v1051 = vadd.f32 %v1045, %v1049
        %v1052 = vadd.f32 %v1046, %v1050
        %s1053 = scalar_lea.vmem %s294, 112 [#allocation13]
        %1054 = vst.msk [vmem:[%s1053] sm:$0xff] %vm850, %v1051
        %1055 = vst.msk [vmem:[%s1053 + $0x8] sm:$0xff] %vm850, %v1052
        %s1056 = sand.u32 %s143, 1
        %s1057 = scalar_lea.sflag [#allocation5], %s1056
        %s1058 = sand.u32 %s143, 1
        %s1059 = smul.addr %s1058, 128
        %s1060 = scalar_lea.vmem [#allocation13], %s1059
        // Predicated region
        $region61: #{depthwise_separable_conv.1} parent=39 // pred_check
          %p1061 = pneg %p153
        $region62: #{depthwise_separable_conv.1} parent=39 // pred_check_branch
          %1063 = sbr.rel (%p1061) target = $region64
        $region63: #{depthwise_separable_conv.1} parent=39 // pred_region
          %s1065 = ssub.s32 2048, 2048
          %1066 = vsyncadd %s1057, %s1065
          %s1067 = smul.addr %s25, 16
          %s1068 = smul.addr %s1067, 128
          %s1069 = scalar_lea.hbm %s5, %s1068
          %s1070 = sshll.u32 %s1060, 4
          %s1071 = int_to_ptr.vmem [resolvable:$true] %s1070
          %1076 = dma.vmem_to_hbm [thread:$0]  %s1071, 2048, %s1069, %s1057, 128, 128, 8
        $region64: #{depthwise_separable_conv.1} parent=39 // pred_fallthru
          _
      $region40: #{depthwise_separable_conv.1} parent=5 // pred_fallthru
        _
      %p1077 = scmp.le.s32.totalorder 2, %s20
      // Predicated region
      $region65: #{depthwise_separable_conv.1} parent=5 // pred_check
        %p1078 = pneg %p1077
      $region66: #{depthwise_separable_conv.1} parent=5 // pred_check_branch
        %1080 = sbr.rel (%p1078) target = $region68
      $region67: #{depthwise_separable_conv.1} parent=5 // pred_region
        %s1081 = ssub.s32 %s20, 2
        // Predicated region
        $region69: #{depthwise_separable_conv.1} parent=67 // pred_check
          %p1082 = pneg %p159
        $region70: #{depthwise_separable_conv.1} parent=67 // pred_check_branch
          %1084 = sbr.rel (%p1082) target = $region72
        $region71: #{depthwise_separable_conv.1} parent=67 // pred_region
          %s1085 = sand.u32 %s144, 1
          %s1086 = scalar_lea.sflag [#allocation5], %s1085
          %s1087 = sand.u32 %s144, 1
          %s1088 = smul.addr %s1087, 128
          %s1089 = scalar_lea.vmem [#allocation13], %s1088
          %1090 = dma.done %s1086, 2048
        $region72: #{depthwise_separable_conv.1} parent=67 // pred_fallthru
          _
      $region68: #{depthwise_separable_conv.1} parent=5 // pred_fallthru
        _
    $region6: #{depthwise_separable_conv.1} parent=1 // loop_footer
      %s24 = sadd.s32 1, %s20
    $region7: #{depthwise_separable_conv.1} parent=1 // loop_footer_branch
      %19 = sbr.rel target = $region3
    $region8: #{depthwise_separable_conv.1} parent=1 // loop_exit
      _
    %1091 = vsyncpa [#allocation4], 1
    %s1092 = scalar_lea.sflag [#allocation4], 1
    %1093 = vsyncpa %s1092, 1
    %1094 = vsyncpa [#allocation5], 1
    %s1095 = scalar_lea.sflag [#allocation5], 1
    %1096 = vsyncpa %s1095, 1
    %1097 = vsyncpa [#allocation6], 1
    %s1098 = scalar_lea.sflag [#allocation6], 1
    %1099 = vsyncpa %s1098, 1
    %1100 = vsyncpa [#allocation9], 1
    %1101 = vsyncpa [#allocation12], 1

</llo_original>
